<compile_context>
chip_gen: v6e
topology: v6e:2x2x1
jax: 0.10.0
libtpu: 0.0.40
codegen_flags: <defaults>
</compile_context>

<pallas_src>
from functools import partial

import jax
import jax.numpy as jnp
from jax.experimental import pallas as pl
from jax.experimental.pallas import tpu as pltpu  # noqa: F401  (TPU backend / memory spaces)

LANES = 128  # padded head-output width / packed-param lane width


# ----------------------------- packed parameter layout -----------------------

def _round_up(v, m):
    return (v + m - 1) // m * m


def param_layout(num_features, hidden):
    """Static row offsets of each parameter inside the packed (ROWS, 128) buffer."""
    h = hidden
    off = {}
    r = 0
    off["w1"] = r; r += num_features          # (F, H)   in lanes [0:H]
    off["w2"] = r; r += h                     # (H, H)
    off["w3"] = r; r += h                     # (H, H)
    off["attb"] = r; r += 9                   # 3 layers x (att_src, att_dst, bias) rows
    r = _round_up(r, 8)
    off["w_lin"] = r; r += 3 * h              # (3H, C) padded to 128 lanes
    off["b_lin"] = r; r += 1                  # (1, C)  padded to 128 lanes
    rows = _round_up(r, 8)
    return off, rows


def pack_params(params, num_features, hidden, num_classes):
    """Pack all weights into one lane-dense f32 buffer (single DMA into the kernel)."""
    off, rows = param_layout(num_features, hidden)
    h = hidden
    buf = jnp.zeros((rows, LANES), jnp.float32)
    buf = buf.at[off["w1"]:off["w1"] + num_features, 0:h].set(params["w1"])
    buf = buf.at[off["w2"]:off["w2"] + h, 0:h].set(params["w2"])
    buf = buf.at[off["w3"]:off["w3"] + h, 0:h].set(params["w3"])
    attb = jnp.concatenate([
        params["as1"], params["ad1"], params["b1"],
        params["as2"], params["ad2"], params["b2"],
        params["as3"], params["ad3"], params["b3"],
    ], axis=0)                                                     # (9, H)
    buf = buf.at[off["attb"]:off["attb"] + 9, 0:h].set(attb)
    buf = buf.at[off["w_lin"]:off["w_lin"] + 3 * h, 0:num_classes].set(params["w_lin"])
    buf = buf.at[off["b_lin"]:off["b_lin"] + 1, 0:num_classes].set(params["b_lin"])
    return buf


def build_adj_bias(edge_index, num_nodes):
    """Densify edge_index (2, E) into an additive mask: 0.0 where edge j->i (or self
    loop), -1e30 otherwise.  Hoisted out of the forward path (static graph).

    Invariant: every row has at least one 0.0 entry (the self loop), otherwise the
    softmax degenerates to uniform attention over non-neighbors.
    """
    src, dst = edge_index[0], edge_index[1]
    adj = jnp.zeros((num_nodes, num_nodes), jnp.float32).at[dst, src].set(1.0)
    adj = jnp.maximum(adj, jnp.eye(num_nodes, dtype=jnp.float32))
    return jnp.where(adj > 0, 0.0, -1e30).astype(jnp.float32)


# ----------------------------- fused Pallas kernel ---------------------------

def _node_gat_kernel(x_ref, bias_ref, p_ref, out_ref, *, num_features, hidden, off):
    """3 x (GATConv(heads=1) + F.normalize(p=2, dim=1) + ReLU) + Linear, all in VMEM."""
    h_dim = hidden
    adj_bias = bias_ref[...]                                        # (N, N) additive mask

    # --- carve parameters out of the single packed buffer (static slices) ---
    w1 = p_ref[off["w1"]:off["w1"] + num_features, 0:h_dim]         # (F, H)
    w2 = p_ref[off["w2"]:off["w2"] + h_dim, 0:h_dim]                # (H, H)
    w3 = p_ref[off["w3"]:off["w3"] + h_dim, 0:h_dim]                # (H, H)
    a = off["attb"]
    as1, ad1, b1 = p_ref[a + 0:a + 1, 0:h_dim], p_ref[a + 1:a + 2, 0:h_dim], p_ref[a + 2:a + 3, 0:h_dim]
    as2, ad2, b2 = p_ref[a + 3:a + 4, 0:h_dim], p_ref[a + 4:a + 5, 0:h_dim], p_ref[a + 5:a + 6, 0:h_dim]
    as3, ad3, b3 = p_ref[a + 6:a + 7, 0:h_dim], p_ref[a + 7:a + 8, 0:h_dim], p_ref[a + 8:a + 9, 0:h_dim]
    wl = off["w_lin"]
    wl1 = p_ref[wl:wl + h_dim, :]                                   # (H, 128)
    wl2 = p_ref[wl + h_dim:wl + 2 * h_dim, :]
    wl3 = p_ref[wl + 2 * h_dim:wl + 3 * h_dim, :]
    blin = p_ref[off["b_lin"]:off["b_lin"] + 1, :]                  # (1, 128)

    def gat_layer(xin, w, a_src_vec, a_dst_vec, bias):
        # Linear transform (MXU).
        h = jnp.dot(xin, w, preferred_element_type=jnp.float32)                 # (N, H)

        # Per-node attention logits on the MXU (no transpose / lane reduce):
        #   a_src_row[0, j] = <h_j, att_src>,  a_dst_col[i, 0] = <h_i, att_dst>
        a_src_row = jax.lax.dot_general(
            a_src_vec, h, (((1,), (1,)), ((), ())),
            preferred_element_type=jnp.float32)                                 # (1, N)
        a_dst_col = jax.lax.dot_general(
            h, a_dst_vec, (((1,), (1,)), ((), ())),
            preferred_element_type=jnp.float32)                                 # (N, 1)

        # e[i, j] = leaky_relu(a_dst[i] + a_src[j], 0.2) + adj_bias[i, j]
        e = a_dst_col + a_src_row                                                # (N, N)
        e = jnp.where(e > 0, e, 0.2 * e)
        e = e + adj_bias                                                         # additive mask

        # Row softmax over source nodes j (self loops guarantee >=1 valid entry).
        m = jnp.max(e, axis=-1, keepdims=True)
        p = jnp.exp(e - m)
        denom = jnp.sum(p, axis=-1, keepdims=True)
        alpha = p * pl.reciprocal(denom, approx=False)                           # exact

        out = jnp.dot(alpha, h, preferred_element_type=jnp.float32) + bias       # (N, H)

        # F.normalize(out, p=2, dim=1): divide by max(||out||, 1e-12).
        sq = jnp.sum(out * out, axis=-1, keepdims=True)
        out = out * jax.lax.rsqrt(jnp.maximum(sq, jnp.float32(1e-24)))           # EUP

        return jnp.maximum(out, 0.0)                                             # ReLU

    # Layers + incremental head accumulation (shortens live ranges of out1/out2).
    out1 = gat_layer(x_ref[...], w1, as1, ad1, b1)
    logits = jnp.dot(out1, wl1, preferred_element_type=jnp.float32) + blin       # (N, 128)
    out2 = gat_layer(out1, w2, as2, ad2, b2)
    logits = logits + jnp.dot(out2, wl2, preferred_element_type=jnp.float32)
    out3 = gat_layer(out2, w3, as3, ad3, b3)
    logits = logits + jnp.dot(out3, wl3, preferred_element_type=jnp.float32)

    out_ref[...] = logits


# ------------------------------ wrapper ---------------------------------------

def _full_spec(shape):
    return pl.BlockSpec(shape, lambda: (0,) * len(shape))


@partial(jax.jit, static_argnames=("num_features", "hidden", "num_classes"))
def node_gat_forward(x, adj_bias, packed, *, num_features, hidden, num_classes):
    n = x.shape[0]
    off, rows = param_layout(num_features, hidden)
    assert packed.shape == (rows, LANES)

    kernel = partial(_node_gat_kernel, num_features=num_features, hidden=hidden, off=off)

    # Advisory cost hint for XLA's scheduler around this tiny custom call.
    f, h = num_features, hidden
    flops = (2 * n * f * h + 2 * 2 * n * h * h            # per-layer x @ W
             + 3 * (2 * n * h + 2 * n * h)                 # attention logits
             + 3 * (2 * n * n * h)                         # alpha @ h
             + 3 * (2 * n * h * LANES))                    # head matmuls
    transcendentals = 3 * (n * n + 2 * n)                  # exp + rsqrt + reciprocal
    bytes_accessed = 4 * (x.size + adj_bias.size + packed.size + n * LANES)
    cost = pl.CostEstimate(flops=flops, transcendentals=transcendentals,
                           bytes_accessed=bytes_accessed)

    out = pl.pallas_call(
        kernel,
        out_shape=jax.ShapeDtypeStruct((n, LANES), jnp.float32),
        in_specs=[
            _full_spec(x.shape),
            _full_spec(adj_bias.shape),
            _full_spec(packed.shape),
        ],
        out_specs=_full_spec((n, LANES)),
        cost_estimate=cost,
    )(x, adj_bias, packed)
    return out[:, :num_classes]


# ------------------------------ reference ------------------------------------

def _reference(params, x, adj):
    """Pure-JAX reference of the same math (PyG GATConv heads=1 semantics)."""

    def layer(x, w, a_s, a_d, b):
        h = x @ w
        e = (h * a_d).sum(-1, keepdims=True) + ((h * a_s).sum(-1, keepdims=True)).T
        e = jnp.where(e > 0, e, 0.2 * e)
        e = jnp.where(adj > 0, e, -1e30)
        alpha = jax.nn.softmax(e, axis=-1)
        out = alpha @ h + b
        out = out / jnp.maximum(jnp.linalg.norm(out, axis=-1, keepdims=True), 1e-12)
        return jnp.maximum(out, 0.0)

    o1 = layer(x, params["w1"], params["as1"], params["ad1"], params["b1"])
    o2 = layer(o1, params["w2"], params["as2"], params["ad2"], params["b2"])
    o3 = layer(o2, params["w3"], params["as3"], params["ad3"], params["b3"])
    emb = jnp.concatenate([o1, o2, o3], axis=1)
    return emb @ params["w_lin"] + params["b_lin"]


# --------------------------------- main ---------------------------------------

if __name__ == "__main__":
    N = 64               # nodes
    NUM_FEATURES = 16
    HIDDEN = 32          # hidden_size
    NUM_CLASSES = 8

    key = jax.random.PRNGKey(0)
    ks = jax.random.split(key, 16)

    def glorot(k, shape):
        fan_in, fan_out = shape[0], shape[-1]
        lim = (6.0 / (fan_in + fan_out)) ** 0.5
        return jax.random.uniform(k, shape, jnp.float32, -lim, lim)

    params = {
        # GATConv 1: num_features -> hidden
        "w1": glorot(ks[0], (NUM_FEATURES, HIDDEN)),
        "as1": glorot(ks[1], (1, HIDDEN)),
        "ad1": glorot(ks[2], (1, HIDDEN)),
        "b1": jnp.zeros((1, HIDDEN), jnp.float32),
        # GATConv 2: hidden -> hidden
        "w2": glorot(ks[3], (HIDDEN, HIDDEN)),
        "as2": glorot(ks[4], (1, HIDDEN)),
        "ad2": glorot(ks[5], (1, HIDDEN)),
        "b2": jnp.zeros((1, HIDDEN), jnp.float32),
        # GATConv 3: hidden -> hidden
        "w3": glorot(ks[6], (HIDDEN, HIDDEN)),
        "as3": glorot(ks[7], (1, HIDDEN)),
        "ad3": glorot(ks[8], (1, HIDDEN)),
        "b3": jnp.zeros((1, HIDDEN), jnp.float32),
        # final Linear: 3*hidden -> num_classes  (stored as (3H, C) so x @ W)
        "w_lin": glorot(ks[9], (3 * HIDDEN, NUM_CLASSES)),
        "b_lin": jax.random.normal(ks[10], (1, NUM_CLASSES), jnp.float32) * 0.01,
    }

    # Deterministic inputs: node features + ring graph (both directions) + extra edges.
    x = jax.random.normal(ks[11], (N, NUM_FEATURES), jnp.float32)
    idx = jnp.arange(N)
    src = jnp.concatenate([idx, (idx + 1) % N, idx])
    dst = jnp.concatenate([(idx + 1) % N, idx, (idx + 7) % N])
    edge_index = jnp.stack([src, dst]).astype(jnp.int32)   # (2, E)

    # One-time preprocessing (outside the forward path): dense additive mask + packed params.
    adj_bias = jax.block_until_ready(build_adj_bias(edge_index, N))
    packed = jax.block_until_ready(
        pack_params(params, NUM_FEATURES, HIDDEN, NUM_CLASSES))

    out = node_gat_forward(x, adj_bias, packed,
                           num_features=NUM_FEATURES, hidden=HIDDEN,
                           num_classes=NUM_CLASSES)
    out = jax.block_until_ready(out)

    # Reference check against the unpadded math.
    adj01 = jnp.where(adj_bias == 0, 1.0, 0.0)
    ref = _reference(params, x, adj01)
    assert out.shape == (N, NUM_CLASSES)
    assert jnp.allclose(out, ref, atol=1e-3, rtol=1e-3), "mismatch vs reference"

    print("KERNEL_OK")
</pallas_src>

<mosaic_0001>
module attributes {stable_mosaic.version = 11 : i64} {
  func.func @_node_gat_kernel(%arg0: memref<64x16xf32, #tpu.memory_space<vmem>>, %arg1: memref<64x64xf32, #tpu.memory_space<vmem>>, %arg2: memref<200x128xf32, #tpu.memory_space<vmem>>, %arg3: memref<64x128xf32, #tpu.memory_space<vmem>>) attributes {dimension_semantics = [], scalar_prefetch = 0 : i64, scratch_operands = 0 : i64, tpu.core_type = #tpu.core_type<tc>} {
    %c0 = arith.constant 0 : index
    %c0_0 = arith.constant 0 : index
    %0 = vector.load %arg1[%c0, %c0_0] : memref<64x64xf32, #tpu.memory_space<vmem>>, vector<64x64xf32>
    %c0_1 = arith.constant 0 : index
    %c0_2 = arith.constant 0 : index
    %1 = vector.load %arg2[%c0_1, %c0_2] : memref<200x128xf32, #tpu.memory_space<vmem>>, vector<16x32xf32>
    %c16 = arith.constant 16 : index
    %c0_3 = arith.constant 0 : index
    %2 = vector.load %arg2[%c16, %c0_3] : memref<200x128xf32, #tpu.memory_space<vmem>>, vector<32x32xf32>
    %c48 = arith.constant 48 : index
    %c0_4 = arith.constant 0 : index
    %3 = vector.load %arg2[%c48, %c0_4] : memref<200x128xf32, #tpu.memory_space<vmem>>, vector<32x32xf32>
    %c80 = arith.constant 80 : index
    %c0_5 = arith.constant 0 : index
    %4 = vector.load %arg2[%c80, %c0_5] : memref<200x128xf32, #tpu.memory_space<vmem>>, vector<1x32xf32>
    %c81 = arith.constant 81 : index
    %c0_6 = arith.constant 0 : index
    %5 = vector.load %arg2[%c81, %c0_6] : memref<200x128xf32, #tpu.memory_space<vmem>>, vector<1x32xf32>
    %c82 = arith.constant 82 : index
    %c0_7 = arith.constant 0 : index
    %6 = vector.load %arg2[%c82, %c0_7] : memref<200x128xf32, #tpu.memory_space<vmem>>, vector<1x32xf32>
    %c83 = arith.constant 83 : index
    %c0_8 = arith.constant 0 : index
    %7 = vector.load %arg2[%c83, %c0_8] : memref<200x128xf32, #tpu.memory_space<vmem>>, vector<1x32xf32>
    %c84 = arith.constant 84 : index
    %c0_9 = arith.constant 0 : index
    %8 = vector.load %arg2[%c84, %c0_9] : memref<200x128xf32, #tpu.memory_space<vmem>>, vector<1x32xf32>
    %c85 = arith.constant 85 : index
    %c0_10 = arith.constant 0 : index
    %9 = vector.load %arg2[%c85, %c0_10] : memref<200x128xf32, #tpu.memory_space<vmem>>, vector<1x32xf32>
    %c86 = arith.constant 86 : index
    %c0_11 = arith.constant 0 : index
    %10 = vector.load %arg2[%c86, %c0_11] : memref<200x128xf32, #tpu.memory_space<vmem>>, vector<1x32xf32>
    %c87 = arith.constant 87 : index
    %c0_12 = arith.constant 0 : index
    %11 = vector.load %arg2[%c87, %c0_12] : memref<200x128xf32, #tpu.memory_space<vmem>>, vector<1x32xf32>
    %c88 = arith.constant 88 : index
    %c0_13 = arith.constant 0 : index
    %12 = vector.load %arg2[%c88, %c0_13] : memref<200x128xf32, #tpu.memory_space<vmem>>, vector<1x32xf32>
    %c96 = arith.constant 96 : index
    %c0_14 = arith.constant 0 : index
    %13 = vector.load %arg2[%c96, %c0_14] : memref<200x128xf32, #tpu.memory_space<vmem>>, vector<32x128xf32>
    %c128 = arith.constant 128 : index
    %c0_15 = arith.constant 0 : index
    %14 = vector.load %arg2[%c128, %c0_15] : memref<200x128xf32, #tpu.memory_space<vmem>>, vector<32x128xf32>
    %c160 = arith.constant 160 : index
    %c0_16 = arith.constant 0 : index
    %15 = vector.load %arg2[%c160, %c0_16] : memref<200x128xf32, #tpu.memory_space<vmem>>, vector<32x128xf32>
    %c192 = arith.constant 192 : index
    %c0_17 = arith.constant 0 : index
    %16 = vector.load %arg2[%c192, %c0_17] : memref<200x128xf32, #tpu.memory_space<vmem>>, vector<1x128xf32>
    %c0_18 = arith.constant 0 : index
    %c0_19 = arith.constant 0 : index
    %17 = vector.load %arg0[%c0_18, %c0_19] : memref<64x16xf32, #tpu.memory_space<vmem>>, vector<64x16xf32>
    %cst = arith.constant dense<0.000000e+00> : vector<64x32xf32>
    %18 = tpu.matmul %17, %1, %cst {dimension_numbers = #tpu.dot_dimension_numbers<[1], [0], [0], [1], [0, 0, 1, 1], [], []>} : vector<64x16xf32>, vector<16x32xf32>, vector<64x32xf32> -> vector<64x32xf32>
    %cst_20 = arith.constant dense<0.000000e+00> : vector<1x64xf32>
    %19 = tpu.matmul %4, %18, %cst_20 {dimension_numbers = #tpu.dot_dimension_numbers<[1], [1], [0], [0], [0, 0, 1, 0], [], []>} : vector<1x32xf32>, vector<64x32xf32>, vector<1x64xf32> -> vector<1x64xf32>
    %cst_21 = arith.constant dense<0.000000e+00> : vector<64x1xf32>
    %20 = tpu.matmul %18, %5, %cst_21 {dimension_numbers = #tpu.dot_dimension_numbers<[1], [1], [0], [0], [0, 0, 1, 0], [], []>} : vector<64x32xf32>, vector<1x32xf32>, vector<64x1xf32> -> vector<64x1xf32>
    %21 = vector.broadcast %20 : vector<64x1xf32> to vector<64x64xf32>
    %22 = vector.broadcast %19 : vector<1x64xf32> to vector<64x64xf32>
    %23 = arith.addf %21, %22 : vector<64x64xf32>
    %cst_22 = arith.constant 0.000000e+00 : f32
    %24 = vector.broadcast %cst_22 : f32 to vector<64x64xf32>
    %25 = arith.cmpf ogt, %23, %24 : vector<64x64xf32>
    %cst_23 = arith.constant 2.000000e-01 : f32
    %26 = vector.broadcast %cst_23 : f32 to vector<64x64xf32>
    %27 = arith.mulf %26, %23 : vector<64x64xf32>
    %28 = arith.select %25, %23, %27 : vector<64x64xi1>, vector<64x64xf32>
    %29 = arith.addf %28, %0 : vector<64x64xf32>
    %cst_24 = arith.constant dense<0xFF800000> : vector<64xf32>
    %30 = vector.multi_reduction <maximumf>, %29, %cst_24 [1] : vector<64x64xf32> to vector<64xf32>
    %31 = vector.shape_cast %30 : vector<64xf32> to vector<64x1xf32>
    %32 = vector.broadcast %31 : vector<64x1xf32> to vector<64x64xf32>
    %33 = arith.subf %29, %32 : vector<64x64xf32>
    %34 = math.exp %33 : vector<64x64xf32>
    %cst_25 = arith.constant dense<0.000000e+00> : vector<64xf32>
    %35 = vector.multi_reduction <add>, %34, %cst_25 [1] : vector<64x64xf32> to vector<64xf32>
    %36 = vector.shape_cast %35 : vector<64xf32> to vector<64x1xf32>
    %37 = tpu.reciprocal %36 : vector<64x1xf32> -> vector<64x1xf32>
    %38 = vector.broadcast %37 : vector<64x1xf32> to vector<64x64xf32>
    %39 = arith.mulf %34, %38 : vector<64x64xf32>
    %cst_26 = arith.constant dense<0.000000e+00> : vector<64x32xf32>
    %40 = tpu.matmul %39, %18, %cst_26 {dimension_numbers = #tpu.dot_dimension_numbers<[1], [0], [0], [1], [0, 0, 1, 1], [], []>} : vector<64x64xf32>, vector<64x32xf32>, vector<64x32xf32> -> vector<64x32xf32>
    %41 = vector.broadcast %6 : vector<1x32xf32> to vector<64x32xf32>
    %42 = arith.addf %40, %41 : vector<64x32xf32>
    %43 = arith.mulf %42, %42 : vector<64x32xf32>
    %cst_27 = arith.constant dense<0.000000e+00> : vector<64xf32>
    %44 = vector.multi_reduction <add>, %43, %cst_27 [1] : vector<64x32xf32> to vector<64xf32>
    %45 = vector.shape_cast %44 : vector<64xf32> to vector<64x1xf32>
    %cst_28 = arith.constant 1.000000e-24 : f32
    %46 = vector.broadcast %cst_28 : f32 to vector<64x1xf32>
    %47 = arith.maximumf %45, %46 : vector<64x1xf32>
    %48 = math.rsqrt %47 : vector<64x1xf32>
    %49 = vector.broadcast %48 : vector<64x1xf32> to vector<64x32xf32>
    %50 = arith.mulf %42, %49 : vector<64x32xf32>
    %cst_29 = arith.constant 0.000000e+00 : f32
    %51 = vector.broadcast %cst_29 : f32 to vector<64x32xf32>
    %52 = arith.maximumf %50, %51 : vector<64x32xf32>
    %cst_30 = arith.constant dense<0.000000e+00> : vector<64x128xf32>
    %53 = tpu.matmul %52, %13, %cst_30 {dimension_numbers = #tpu.dot_dimension_numbers<[1], [0], [0], [1], [0, 0, 1, 1], [], []>} : vector<64x32xf32>, vector<32x128xf32>, vector<64x128xf32> -> vector<64x128xf32>
    %54 = vector.broadcast %16 : vector<1x128xf32> to vector<64x128xf32>
    %55 = arith.addf %53, %54 : vector<64x128xf32>
    %cst_31 = arith.constant dense<0.000000e+00> : vector<64x32xf32>
    %56 = tpu.matmul %52, %2, %cst_31 {dimension_numbers = #tpu.dot_dimension_numbers<[1], [0], [0], [1], [0, 0, 1, 1], [], []>} : vector<64x32xf32>, vector<32x32xf32>, vector<64x32xf32> -> vector<64x32xf32>
    %cst_32 = arith.constant dense<0.000000e+00> : vector<1x64xf32>
    %57 = tpu.matmul %7, %56, %cst_32 {dimension_numbers = #tpu.dot_dimension_numbers<[1], [1], [0], [0], [0, 0, 1, 0], [], []>} : vector<1x32xf32>, vector<64x32xf32>, vector<1x64xf32> -> vector<1x64xf32>
    %cst_33 = arith.constant dense<0.000000e+00> : vector<64x1xf32>
    %58 = tpu.matmul %56, %8, %cst_33 {dimension_numbers = #tpu.dot_dimension_numbers<[1], [1], [0], [0], [0, 0, 1, 0], [], []>} : vector<64x32xf32>, vector<1x32xf32>, vector<64x1xf32> -> vector<64x1xf32>
    %59 = vector.broadcast %58 : vector<64x1xf32> to vector<64x64xf32>
    %60 = vector.broadcast %57 : vector<1x64xf32> to vector<64x64xf32>
    %61 = arith.addf %59, %60 : vector<64x64xf32>
    %cst_34 = arith.constant 0.000000e+00 : f32
    %62 = vector.broadcast %cst_34 : f32 to vector<64x64xf32>
    %63 = arith.cmpf ogt, %61, %62 : vector<64x64xf32>
    %cst_35 = arith.constant 2.000000e-01 : f32
    %64 = vector.broadcast %cst_35 : f32 to vector<64x64xf32>
    %65 = arith.mulf %64, %61 : vector<64x64xf32>
    %66 = arith.select %63, %61, %65 : vector<64x64xi1>, vector<64x64xf32>
    %67 = arith.addf %66, %0 : vector<64x64xf32>
    %cst_36 = arith.constant dense<0xFF800000> : vector<64xf32>
    %68 = vector.multi_reduction <maximumf>, %67, %cst_36 [1] : vector<64x64xf32> to vector<64xf32>
    %69 = vector.shape_cast %68 : vector<64xf32> to vector<64x1xf32>
    %70 = vector.broadcast %69 : vector<64x1xf32> to vector<64x64xf32>
    %71 = arith.subf %67, %70 : vector<64x64xf32>
    %72 = math.exp %71 : vector<64x64xf32>
    %cst_37 = arith.constant dense<0.000000e+00> : vector<64xf32>
    %73 = vector.multi_reduction <add>, %72, %cst_37 [1] : vector<64x64xf32> to vector<64xf32>
    %74 = vector.shape_cast %73 : vector<64xf32> to vector<64x1xf32>
    %75 = tpu.reciprocal %74 : vector<64x1xf32> -> vector<64x1xf32>
    %76 = vector.broadcast %75 : vector<64x1xf32> to vector<64x64xf32>
    %77 = arith.mulf %72, %76 : vector<64x64xf32>
    %cst_38 = arith.constant dense<0.000000e+00> : vector<64x32xf32>
    %78 = tpu.matmul %77, %56, %cst_38 {dimension_numbers = #tpu.dot_dimension_numbers<[1], [0], [0], [1], [0, 0, 1, 1], [], []>} : vector<64x64xf32>, vector<64x32xf32>, vector<64x32xf32> -> vector<64x32xf32>
    %79 = vector.broadcast %9 : vector<1x32xf32> to vector<64x32xf32>
    %80 = arith.addf %78, %79 : vector<64x32xf32>
    %81 = arith.mulf %80, %80 : vector<64x32xf32>
    %cst_39 = arith.constant dense<0.000000e+00> : vector<64xf32>
    %82 = vector.multi_reduction <add>, %81, %cst_39 [1] : vector<64x32xf32> to vector<64xf32>
    %83 = vector.shape_cast %82 : vector<64xf32> to vector<64x1xf32>
    %cst_40 = arith.constant 1.000000e-24 : f32
    %84 = vector.broadcast %cst_40 : f32 to vector<64x1xf32>
    %85 = arith.maximumf %83, %84 : vector<64x1xf32>
    %86 = math.rsqrt %85 : vector<64x1xf32>
    %87 = vector.broadcast %86 : vector<64x1xf32> to vector<64x32xf32>
    %88 = arith.mulf %80, %87 : vector<64x32xf32>
    %cst_41 = arith.constant 0.000000e+00 : f32
    %89 = vector.broadcast %cst_41 : f32 to vector<64x32xf32>
    %90 = arith.maximumf %88, %89 : vector<64x32xf32>
    %cst_42 = arith.constant dense<0.000000e+00> : vector<64x128xf32>
    %91 = tpu.matmul %90, %14, %cst_42 {dimension_numbers = #tpu.dot_dimension_numbers<[1], [0], [0], [1], [0, 0, 1, 1], [], []>} : vector<64x32xf32>, vector<32x128xf32>, vector<64x128xf32> -> vector<64x128xf32>
    %92 = arith.addf %55, %91 : vector<64x128xf32>
    %cst_43 = arith.constant dense<0.000000e+00> : vector<64x32xf32>
    %93 = tpu.matmul %90, %3, %cst_43 {dimension_numbers = #tpu.dot_dimension_numbers<[1], [0], [0], [1], [0, 0, 1, 1], [], []>} : vector<64x32xf32>, vector<32x32xf32>, vector<64x32xf32> -> vector<64x32xf32>
    %cst_44 = arith.constant dense<0.000000e+00> : vector<1x64xf32>
    %94 = tpu.matmul %10, %93, %cst_44 {dimension_numbers = #tpu.dot_dimension_numbers<[1], [1], [0], [0], [0, 0, 1, 0], [], []>} : vector<1x32xf32>, vector<64x32xf32>, vector<1x64xf32> -> vector<1x64xf32>
    %cst_45 = arith.constant dense<0.000000e+00> : vector<64x1xf32>
    %95 = tpu.matmul %93, %11, %cst_45 {dimension_numbers = #tpu.dot_dimension_numbers<[1], [1], [0], [0], [0, 0, 1, 0], [], []>} : vector<64x32xf32>, vector<1x32xf32>, vector<64x1xf32> -> vector<64x1xf32>
    %96 = vector.broadcast %95 : vector<64x1xf32> to vector<64x64xf32>
    %97 = vector.broadcast %94 : vector<1x64xf32> to vector<64x64xf32>
    %98 = arith.addf %96, %97 : vector<64x64xf32>
    %cst_46 = arith.constant 0.000000e+00 : f32
    %99 = vector.broadcast %cst_46 : f32 to vector<64x64xf32>
    %100 = arith.cmpf ogt, %98, %99 : vector<64x64xf32>
    %cst_47 = arith.constant 2.000000e-01 : f32
    %101 = vector.broadcast %cst_47 : f32 to vector<64x64xf32>
    %102 = arith.mulf %101, %98 : vector<64x64xf32>
    %103 = arith.select %100, %98, %102 : vector<64x64xi1>, vector<64x64xf32>
    %104 = arith.addf %103, %0 : vector<64x64xf32>
    %cst_48 = arith.constant dense<0xFF800000> : vector<64xf32>
    %105 = vector.multi_reduction <maximumf>, %104, %cst_48 [1] : vector<64x64xf32> to vector<64xf32>
    %106 = vector.shape_cast %105 : vector<64xf32> to vector<64x1xf32>
    %107 = vector.broadcast %106 : vector<64x1xf32> to vector<64x64xf32>
    %108 = arith.subf %104, %107 : vector<64x64xf32>
    %109 = math.exp %108 : vector<64x64xf32>
    %cst_49 = arith.constant dense<0.000000e+00> : vector<64xf32>
    %110 = vector.multi_reduction <add>, %109, %cst_49 [1] : vector<64x64xf32> to vector<64xf32>
    %111 = vector.shape_cast %110 : vector<64xf32> to vector<64x1xf32>
    %112 = tpu.reciprocal %111 : vector<64x1xf32> -> vector<64x1xf32>
    %113 = vector.broadcast %112 : vector<64x1xf32> to vector<64x64xf32>
    %114 = arith.mulf %109, %113 : vector<64x64xf32>
    %cst_50 = arith.constant dense<0.000000e+00> : vector<64x32xf32>
    %115 = tpu.matmul %114, %93, %cst_50 {dimension_numbers = #tpu.dot_dimension_numbers<[1], [0], [0], [1], [0, 0, 1, 1], [], []>} : vector<64x64xf32>, vector<64x32xf32>, vector<64x32xf32> -> vector<64x32xf32>
    %116 = vector.broadcast %12 : vector<1x32xf32> to vector<64x32xf32>
    %117 = arith.addf %115, %116 : vector<64x32xf32>
    %118 = arith.mulf %117, %117 : vector<64x32xf32>
    %cst_51 = arith.constant dense<0.000000e+00> : vector<64xf32>
    %119 = vector.multi_reduction <add>, %118, %cst_51 [1] : vector<64x32xf32> to vector<64xf32>
    %120 = vector.shape_cast %119 : vector<64xf32> to vector<64x1xf32>
    %cst_52 = arith.constant 1.000000e-24 : f32
    %121 = vector.broadcast %cst_52 : f32 to vector<64x1xf32>
    %122 = arith.maximumf %120, %121 : vector<64x1xf32>
    %123 = math.rsqrt %122 : vector<64x1xf32>
    %124 = vector.broadcast %123 : vector<64x1xf32> to vector<64x32xf32>
    %125 = arith.mulf %117, %124 : vector<64x32xf32>
    %cst_53 = arith.constant 0.000000e+00 : f32
    %126 = vector.broadcast %cst_53 : f32 to vector<64x32xf32>
    %127 = arith.maximumf %125, %126 : vector<64x32xf32>
    %cst_54 = arith.constant dense<0.000000e+00> : vector<64x128xf32>
    %128 = tpu.matmul %127, %15, %cst_54 {dimension_numbers = #tpu.dot_dimension_numbers<[1], [0], [0], [1], [0, 0, 1, 1], [], []>} : vector<64x32xf32>, vector<32x128xf32>, vector<64x128xf32> -> vector<64x128xf32>
    %129 = arith.addf %92, %128 : vector<64x128xf32>
    %c0_55 = arith.constant 0 : index
    %c0_56 = arith.constant 0 : index
    %130 = vector.load %arg3[%c0_55, %c0_56] : memref<64x128xf32, #tpu.memory_space<vmem>>, vector<64x128xf32>
    tpu.vector_store %arg3[%c0_55, %c0_56], %129 {strides = array<i32>} : memref<64x128xf32, #tpu.memory_space<vmem>>, vector<64x128xf32>,
    return
  }
}

</mosaic_0001>

<llo_original>
// kernel: node_gat_forward.1
$region0: #{node_gat_forward.1}
  #allocation0 [shape = 'u32[]', space=smem, size = 0x4, offset = 0x4, fixed_abs, tag = 'smem constant byte address 0x4 - core index']
  #allocation1 [shape = 'u32[144,128]{1,0:T(1,128)}', space=vmem, size = 0x12000, scoped, tag = 'internal scratch']
  %s0 = inlined_call_operand.vmem [shape: f32[64,16], index: 0, kind: input, shape index: {}]
  %s1 = inlined_call_operand.vmem [shape: f32[64,64], index: 1, kind: input, shape index: {}]
  %s2 = inlined_call_operand.hbm [shape: f32[200,128], index: 2, kind: input, shape index: {}]
  %s3 = inlined_call_operand.vmem [shape: f32[64,128], index: 3, kind: output, shape index: {}]
  %s4 = sld [smem:[#allocation0]]
  $region26: #{node_gat_forward.1} parent=0
    _
  %s6 = ssub.s32 1, %s4
  %s7 = scalar_select 0, %s6, %s4
  $region1: #{node_gat_forward.1} parent=0
    #allocation2 [shape = 'u8[102400]{0}', space=vmem, size = 0x19000, scoped, tag = 'input window, operand 2, single buffered']
    #allocation3 [shape = 's32[1]{0}', space=sflag, size = 0x4, scoped, tag = 'scoped memory for node_gat_forward.1']
    %8 = vsyncpa [#allocation3], 0
    // Predicated region
    $region2: #{node_gat_forward.1} parent=1 // pred_check
      _
    $region3: #{node_gat_forward.1} parent=1 // pred_check_branch
      %10 = sbr.rel (0) target = $region5
    $region4: #{node_gat_forward.1} parent=1 // pred_region
      _
    $region5: #{node_gat_forward.1} parent=1 // pred_fallthru
      _
    // Predicated region
    $region6: #{node_gat_forward.1} parent=1 // pred_check
      _
    $region7: #{node_gat_forward.1} parent=1 // pred_check_branch
      %12 = sbr.rel (0) target = $region9
    $region8: #{node_gat_forward.1} parent=1 // pred_region
      _
    $region9: #{node_gat_forward.1} parent=1 // pred_fallthru
      _
    // Predicated region
    $region10: #{node_gat_forward.1} parent=1 // pred_check
      _
    $region11: #{node_gat_forward.1} parent=1 // pred_check_branch
      %14 = sbr.rel (0) target = $region13
    $region12: #{node_gat_forward.1} parent=1 // pred_region
      %s16 = ssub.s32 3200, 3200
      %17 = vsyncadd [#allocation3], %s16
      %s18 = sshll.u32 [#allocation2], 4
      %s19 = int_to_ptr.vmem [resolvable:$true] %s18
      %24 = dma.hbm_to_vmem [thread:$0]  %s2, 3200, %s19, [#allocation3], 128, 128, 8
    $region13: #{node_gat_forward.1} parent=1 // pred_fallthru
      _
    // Predicated region
    $region14: #{node_gat_forward.1} parent=1 // pred_check
      _
    $region15: #{node_gat_forward.1} parent=1 // pred_check_branch
      %26 = sbr.rel (0) target = $region17
    $region16: #{node_gat_forward.1} parent=1 // pred_region
      %27 = dma.done [#allocation3], 3200
    $region17: #{node_gat_forward.1} parent=1 // pred_fallthru
      _
    %v28 = vld [vmem:[%s1] sm:$0xff]
    %v29 = vld [vmem:[%s1 + $0x8] sm:$0xff]
    %v30 = vld [vmem:[%s1 + $0x10] sm:$0xff]
    %v31 = vld [vmem:[%s1 + $0x18] sm:$0xff]
    %v32 = vld [vmem:[%s1 + $0x20] sm:$0xff]
    %v33 = vld [vmem:[%s1 + $0x28] sm:$0xff]
    %v34 = vld [vmem:[%s1 + $0x30] sm:$0xff]
    %v35 = vld [vmem:[%s1 + $0x38] sm:$0xff]
    %v36 = vld [vmem:[#allocation2] sm:$0xff]
    %v37 = vld [vmem:[#allocation2 + $0x8] sm:$0xff]
    %v38 = vld [vmem:[#allocation2 + $0x10] sm:$0xff]
    %v39 = vld [vmem:[#allocation2 + $0x18] sm:$0xff]
    %v40 = vld [vmem:[#allocation2 + $0x20] sm:$0xff]
    %v41 = vld [vmem:[#allocation2 + $0x28] sm:$0xff]
    %v42 = vld [vmem:[#allocation2 + $0x30] sm:$0xff]
    %v43 = vld [vmem:[#allocation2 + $0x38] sm:$0xff]
    %v44 = vld [vmem:[#allocation2 + $0x40] sm:$0xff]
    %v45 = vld [vmem:[#allocation2 + $0x48] sm:$0xff]
    %v46 = vld [vmem:[#allocation2 + $0x50] sm:$0x1]
    %v47 = vld [vmem:[#allocation2 + $0x51] sm:$0x1]
    %v48 = vld [vmem:[#allocation2 + $0x52] sm:$0x1]
    %v49 = vld [vmem:[#allocation2 + $0x53] sm:$0x1]
    %v50 = vld [vmem:[#allocation2 + $0x54] sm:$0x1]
    %v51 = vld [vmem:[#allocation2 + $0x55] sm:$0x1]
    %v52 = vld [vmem:[#allocation2 + $0x56] sm:$0x1]
    %v53 = vld [vmem:[#allocation2 + $0x57] sm:$0x1]
    %v54 = vld [vmem:[#allocation2 + $0x58] sm:$0x1]
    %v55 = vld [vmem:[#allocation2 + $0x60] sm:$0xff]
    %v56 = vld [vmem:[#allocation2 + $0x68] sm:$0xff]
    %v57 = vld [vmem:[#allocation2 + $0x70] sm:$0xff]
    %v58 = vld [vmem:[#allocation2 + $0x78] sm:$0xff]
    %v59 = vld [vmem:[#allocation2 + $0x80] sm:$0xff]
    %v60 = vld [vmem:[#allocation2 + $0x88] sm:$0xff]
    %v61 = vld [vmem:[#allocation2 + $0x90] sm:$0xff]
    %v62 = vld [vmem:[#allocation2 + $0x98] sm:$0xff]
    %v63 = vld [vmem:[#allocation2 + $0xa0] sm:$0xff]
    %v64 = vld [vmem:[#allocation2 + $0xa8] sm:$0xff]
    %v65 = vld [vmem:[#allocation2 + $0xb0] sm:$0xff]
    %v66 = vld [vmem:[#allocation2 + $0xb8] sm:$0xff]
    %v67 = vld [vmem:[#allocation2 + $0xc0] sm:$0x1]
    %v68 = vld [vmem:[%s0] sm:$0xff]
    %v69 = vld [vmem:[%s0 + $0x8] sm:$0xff]
    %v70 = vld [vmem:[%s0 + $0x10] sm:$0xff]
    %v71 = vld [vmem:[%s0 + $0x18] sm:$0xff]
    %v72 = vld [vmem:[%s0 + $0x20] sm:$0xff]
    %v73 = vld [vmem:[%s0 + $0x28] sm:$0xff]
    %v74 = vld [vmem:[%s0 + $0x30] sm:$0xff]
    %v75 = vld [vmem:[%s0 + $0x38] sm:$0xff]
    %vm76 = vcmask 130048
    %v78 = vsel %vm76, %v68, 0
    %v81 = vsel %vm76, %v69, 0
    %v84 = vsel %vm76, %v70, 0
    %v87 = vsel %vm76, %v71, 0
    %v90 = vsel %vm76, %v72, 0
    %v93 = vsel %vm76, %v73, 0
    %v96 = vsel %vm76, %v74, 0
    %v99 = vsel %vm76, %v75, 0
    %101 = vmatprep.subr.mxu0 0.0
    %102 = vmatpush1.msra.mxu0 0.0
    %103 = vmatprep.subr.mxu0 0.0
    %104 = vmatpush1.msra.mxu0 0.0
    %105 = vmatprep.subr.mxu0 0.0
    %106 = vmatpush1.msra.mxu0 0.0
    %107 = vmatprep.subr.mxu0 0.0
    %108 = vmatpush1.msra.mxu0 0.0
    %109 = vmatprep.subr.mxu0 0.0
    %110 = vmatpush1.msra.mxu0 0.0
    %111 = vmatprep.subr.mxu0 0.0
    %112 = vmatpush1.msra.mxu0 0.0
    %113 = vmatprep.subr.mxu0 0.0
    %114 = vmatpush1.msra.mxu0 0.0
    %115 = vmatprep.subr.mxu0 0.0
    %116 = vmatpush1.msra.mxu0 0.0
    %117 = vmatprep.subr.mxu0 0.0
    %118 = vmatpush1.msra.mxu0 0.0
    %119 = vmatprep.subr.mxu0 0.0
    %120 = vmatpush1.msra.mxu0 0.0
    %121 = vmatprep.subr.mxu0 0.0
    %122 = vmatpush1.msra.mxu0 0.0
    %123 = vmatprep.subr.mxu0 0.0
    %124 = vmatpush1.msra.mxu0 0.0
    %125 = vmatprep.subr.mxu0 0.0
    %126 = vmatpush1.msra.mxu0 0.0
    %127 = vmatprep.subr.mxu0 0.0
    %128 = vmatpush1.msra.mxu0 0.0
    %129 = vmatprep.subr.mxu0 0.0
    %130 = vmatpush1.msra.mxu0 %v37
    %131 = vmatprep.subr.mxu0 0.0
    %132 = vmatpush1.msra.mxu0 %v36
    %133 = vmatprep.subr.mxu0 0.0
    %134 = vmatpush2.msra.mxu0 0.0
    %135 = vmatprep.subr.mxu0 0.0
    %136 = vmatpush2.msra.mxu0 0.0
    %137 = vmatprep.subr.mxu0 0.0
    %138 = vmatpush2.msra.mxu0 0.0
    %139 = vmatprep.subr.mxu0 0.0
    %140 = vmatpush2.msra.mxu0 0.0
    %141 = vmatprep.subr.mxu0 0.0
    %142 = vmatpush2.msra.mxu0 0.0
    %143 = vmatprep.subr.mxu0 0.0
    %144 = vmatpush2.msra.mxu0 0.0
    %145 = vmatprep.subr.mxu0 0.0
    %146 = vmatpush2.msra.mxu0 0.0
    %147 = vmatprep.subr.mxu0 0.0
    %148 = vmatpush2.msra.mxu0 0.0
    %149 = vmatprep.subr.mxu0 0.0
    %150 = vmatpush2.msra.mxu0 0.0
    %151 = vmatprep.subr.mxu0 0.0
    %152 = vmatpush2.msra.mxu0 0.0
    %153 = vmatprep.subr.mxu0 0.0
    %154 = vmatpush2.msra.mxu0 0.0
    %155 = vmatprep.subr.mxu0 0.0
    %156 = vmatpush2.msra.mxu0 0.0
    %157 = vmatprep.subr.mxu0 0.0
    %158 = vmatpush2.msra.mxu0 0.0
    %159 = vmatprep.subr.mxu0 0.0
    %160 = vmatpush2.msra.mxu0 0.0
    %161 = vmatprep.subr.mxu0 0.0
    %162 = vmatpush2.msra.mxu0 0.0
    %163 = vmatprep.subr.mxu0 0.0
    %164 = vmatpush2.msra.mxu0 0.0
    %165 = vmatprep.mubr.f32.mxu0 0.0
    %166 = vmatmul.mubr.f32.gmra.mxu0 %v78
    %v167 = vpop.f32.mrf.mxu0
    %v168 = vadd.f32 0.0, %v167
    %v169 = vpop.f32.mrf.mxu0
    %170 = vmatprep.mubr.f32.mxu0 0.0
    %171 = vmatmul.mubr.f32.gmra.mxu0 %v81
    %v172 = vpop.f32.mrf.mxu0
    %v173 = vadd.f32 0.0, %v172
    %v174 = vpop.f32.mrf.mxu0
    %175 = vmatprep.mubr.f32.mxu0 0.0
    %176 = vmatmul.mubr.f32.gmra.mxu0 %v84
    %v177 = vpop.f32.mrf.mxu0
    %v178 = vadd.f32 0.0, %v177
    %v179 = vpop.f32.mrf.mxu0
    %180 = vmatprep.mubr.f32.mxu0 0.0
    %181 = vmatmul.mubr.f32.gmra.mxu0 %v87
    %v182 = vpop.f32.mrf.mxu0
    %v183 = vadd.f32 0.0, %v182
    %v184 = vpop.f32.mrf.mxu0
    %185 = vmatprep.mubr.f32.mxu0 0.0
    %186 = vmatmul.mubr.f32.gmra.mxu0 %v90
    %v187 = vpop.f32.mrf.mxu0
    %v188 = vadd.f32 0.0, %v187
    %v189 = vpop.f32.mrf.mxu0
    %190 = vmatprep.mubr.f32.mxu0 0.0
    %191 = vmatmul.mubr.f32.gmra.mxu0 %v93
    %v192 = vpop.f32.mrf.mxu0
    %v193 = vadd.f32 0.0, %v192
    %v194 = vpop.f32.mrf.mxu0
    %195 = vmatprep.mubr.f32.mxu0 0.0
    %196 = vmatmul.mubr.f32.gmra.mxu0 %v96
    %v197 = vpop.f32.mrf.mxu0
    %v198 = vadd.f32 0.0, %v197
    %v199 = vpop.f32.mrf.mxu0
    %200 = vmatprep.mubr.f32.mxu0 0.0
    %201 = vmatmul.mubr.f32.gmra.mxu0 %v99
    %v202 = vpop.f32.mrf.mxu0
    %v203 = vadd.f32 0.0, %v202
    %v204 = vpop.f32.mrf.mxu0
    %205 = vdwg.mxu0
    %vm206 = vcmask 261120
    %v208 = vsel %vm206, %v46, 0
    %v211 = vsel %vm206, %v168, 0
    %v214 = vsel %vm206, %v173, 0
    %v217 = vsel %vm206, %v178, 0
    %v220 = vsel %vm206, %v183, 0
    %v223 = vsel %vm206, %v188, 0
    %v226 = vsel %vm206, %v193, 0
    %v229 = vsel %vm206, %v198, 0
    %v232 = vsel %vm206, %v203, 0
    %234 = vmatprep.subr.mxu0 0.0
    %235 = vmatpush1.xpose.msra.mxu0 0.0
    %236 = vmatprep.subr.mxu0 0.0
    %237 = vmatpush1.xpose.msra.mxu0 0.0
    %238 = vmatprep.subr.mxu0 0.0
    %239 = vmatpush1.xpose.msra.mxu0 0.0
    %240 = vmatprep.subr.mxu0 0.0
    %241 = vmatpush1.xpose.msra.mxu0 0.0
    %242 = vmatprep.subr.mxu0 0.0
    %243 = vmatpush1.xpose.msra.mxu0 0.0
    %244 = vmatprep.subr.mxu0 0.0
    %245 = vmatpush1.xpose.msra.mxu0 0.0
    %246 = vmatprep.subr.mxu0 0.0
    %247 = vmatpush1.xpose.msra.mxu0 0.0
    %248 = vmatprep.subr.mxu0 0.0
    %249 = vmatpush1.xpose.msra.mxu0 0.0
    %250 = vmatprep.subr.mxu0 0.0
    %251 = vmatpush1.xpose.msra.mxu0 %v232
    %252 = vmatprep.subr.mxu0 0.0
    %253 = vmatpush1.xpose.msra.mxu0 %v229
    %254 = vmatprep.subr.mxu0 0.0
    %255 = vmatpush1.xpose.msra.mxu0 %v226
    %256 = vmatprep.subr.mxu0 0.0
    %257 = vmatpush1.xpose.msra.mxu0 %v223
    %258 = vmatprep.subr.mxu0 0.0
    %259 = vmatpush1.xpose.msra.mxu0 %v220
    %260 = vmatprep.subr.mxu0 0.0
    %261 = vmatpush1.xpose.msra.mxu0 %v217
    %262 = vmatprep.subr.mxu0 0.0
    %263 = vmatpush1.xpose.msra.mxu0 %v214
    %264 = vmatprep.subr.mxu0 0.0
    %265 = vmatpush1.xpose.msra.mxu0 %v211
    %266 = vmatprep.subr.mxu0 0.0
    %267 = vmatpush2.xpose.msra.mxu0 0.0
    %268 = vmatprep.subr.mxu0 0.0
    %269 = vmatpush2.xpose.msra.mxu0 0.0
    %270 = vmatprep.subr.mxu0 0.0
    %271 = vmatpush2.xpose.msra.mxu0 0.0
    %272 = vmatprep.subr.mxu0 0.0
    %273 = vmatpush2.xpose.msra.mxu0 0.0
    %274 = vmatprep.subr.mxu0 0.0
    %275 = vmatpush2.xpose.msra.mxu0 0.0
    %276 = vmatprep.subr.mxu0 0.0
    %277 = vmatpush2.xpose.msra.mxu0 0.0
    %278 = vmatprep.subr.mxu0 0.0
    %279 = vmatpush2.xpose.msra.mxu0 0.0
    %280 = vmatprep.subr.mxu0 0.0
    %281 = vmatpush2.xpose.msra.mxu0 0.0
    %282 = vmatprep.subr.mxu0 0.0
    %283 = vmatpush2.xpose.msra.mxu0 0.0
    %284 = vmatprep.subr.mxu0 0.0
    %285 = vmatpush2.xpose.msra.mxu0 0.0
    %286 = vmatprep.subr.mxu0 0.0
    %287 = vmatpush2.xpose.msra.mxu0 0.0
    %288 = vmatprep.subr.mxu0 0.0
    %289 = vmatpush2.xpose.msra.mxu0 0.0
    %290 = vmatprep.subr.mxu0 0.0
    %291 = vmatpush2.xpose.msra.mxu0 0.0
    %292 = vmatprep.subr.mxu0 0.0
    %293 = vmatpush2.xpose.msra.mxu0 0.0
    %294 = vmatprep.subr.mxu0 0.0
    %295 = vmatpush2.xpose.msra.mxu0 0.0
    %296 = vmatprep.subr.mxu0 0.0
    %297 = vmatpush2.xpose.msra.mxu0 0.0
    %298 = vmatprep.mubr.f32.mxu0 0.0
    %299 = vmatmul.mubr.f32.gmra.mxu0 %v208
    %v300 = vpop.f32.mrf.mxu0
    %v301 = vadd.f32 0.0, %v300
    %v302 = vpop.f32.mrf.mxu0
    %303 = vdwg.mxu0
    %v304 = vlaneseq
    %v305 = vshrl.u32 %v304, 7
    %v306 = vsub.s32 0, %v305
    %v307 = vrot.slane %v47, %v306
    %v308 = vmul.f32 %v168, %v307
    %v309 = vmul.f32 %v173, %v307
    %v310 = vmul.f32 %v178, %v307
    %v311 = vmul.f32 %v183, %v307
    %v312 = vmul.f32 %v188, %v307
    %v313 = vmul.f32 %v193, %v307
    %v314 = vmul.f32 %v198, %v307
    %v315 = vmul.f32 %v203, %v307
    %v316 = vsel %vm206, %v308, 0.0
    %317 = vadd.xlane.f32.xlu0 %v316
    %v318 = vpop.xlane.xlu0 %317
    %v319 = vsel %vm206, %v309, 0.0
    %320 = vadd.xlane.f32.xlu0 %v319
    %v321 = vpop.xlane.xlu0 %320
    %v322 = vsel %vm206, %v310, 0.0
    %323 = vadd.xlane.f32.xlu0 %v322
    %v324 = vpop.xlane.xlu0 %323
    %v325 = vsel %vm206, %v311, 0.0
    %326 = vadd.xlane.f32.xlu0 %v325
    %v327 = vpop.xlane.xlu0 %326
    %v328 = vsel %vm206, %v312, 0.0
    %329 = vadd.xlane.f32.xlu0 %v328
    %v330 = vpop.xlane.xlu0 %329
    %v331 = vsel %vm206, %v313, 0.0
    %332 = vadd.xlane.f32.xlu0 %v331
    %v333 = vpop.xlane.xlu0 %332
    %v334 = vsel %vm206, %v314, 0.0
    %335 = vadd.xlane.f32.xlu0 %v334
    %v336 = vpop.xlane.xlu0 %335
    %v337 = vsel %vm206, %v315, 0.0
    %338 = vadd.xlane.f32.xlu0 %v337
    %v339 = vpop.xlane.xlu0 %338
    %v340 = vlaneseq
    %v341 = vshrl.u32 %v340, 7
    %v342 = vsub.s32 0, %v341
    %v343 = vrot.slane %v301, %v342
    %v344 = vadd.f32 %v318, %v343
    %v345 = vadd.f32 %v321, %v343
    %v346 = vadd.f32 %v324, %v343
    %v347 = vadd.f32 %v327, %v343
    %v348 = vadd.f32 %v330, %v343
    %v349 = vadd.f32 %v333, %v343
    %v350 = vadd.f32 %v336, %v343
    %v351 = vadd.f32 %v339, %v343
    %vm352 = vcmp.gt.f32.partialorder %v344, 0.0
    %vm353 = vcmp.gt.f32.partialorder %v345, 0.0
    %vm354 = vcmp.gt.f32.partialorder %v346, 0.0
    %vm355 = vcmp.gt.f32.partialorder %v347, 0.0
    %vm356 = vcmp.gt.f32.partialorder %v348, 0.0
    %vm357 = vcmp.gt.f32.partialorder %v349, 0.0
    %vm358 = vcmp.gt.f32.partialorder %v350, 0.0
    %vm359 = vcmp.gt.f32.partialorder %v351, 0.0
    %v360 = vmul.f32 %v344, 0.2
    %v361 = vmul.f32 %v345, 0.2
    %v362 = vmul.f32 %v346, 0.2
    %v363 = vmul.f32 %v347, 0.2
    %v364 = vmul.f32 %v348, 0.2
    %v365 = vmul.f32 %v349, 0.2
    %v366 = vmul.f32 %v350, 0.2
    %v367 = vmul.f32 %v351, 0.2
    %v368 = vsel %vm352, %v344, %v360
    %v369 = vsel %vm353, %v345, %v361
    %v370 = vsel %vm354, %v346, %v362
    %v371 = vsel %vm355, %v347, %v363
    %v372 = vsel %vm356, %v348, %v364
    %v373 = vsel %vm357, %v349, %v365
    %v374 = vsel %vm358, %v350, %v366
    %v375 = vsel %vm359, %v351, %v367
    %v376 = vadd.f32 %v368, %v28
    %v377 = vadd.f32 %v369, %v29
    %v378 = vadd.f32 %v370, %v30
    %v379 = vadd.f32 %v371, %v31
    %v380 = vadd.f32 %v372, %v32
    %v381 = vadd.f32 %v373, %v33
    %v382 = vadd.f32 %v374, %v34
    %v383 = vadd.f32 %v375, %v35
    %vm384 = vcmask 523264
    %v385 = vsel %vm384, %v376, -inf
    %386 = vmax.xlane.f32.xlu0 %v385
    %v387 = vpop.xlane.xlu0 %386
    %v388 = vsel %vm384, %v377, -inf
    %389 = vmax.xlane.f32.xlu0 %v388
    %v390 = vpop.xlane.xlu0 %389
    %v391 = vsel %vm384, %v378, -inf
    %392 = vmax.xlane.f32.xlu0 %v391
    %v393 = vpop.xlane.xlu0 %392
    %v394 = vsel %vm384, %v379, -inf
    %395 = vmax.xlane.f32.xlu0 %v394
    %v396 = vpop.xlane.xlu0 %395
    %v397 = vsel %vm384, %v380, -inf
    %398 = vmax.xlane.f32.xlu0 %v397
    %v399 = vpop.xlane.xlu0 %398
    %v400 = vsel %vm384, %v381, -inf
    %401 = vmax.xlane.f32.xlu0 %v400
    %v402 = vpop.xlane.xlu0 %401
    %v403 = vsel %vm384, %v382, -inf
    %404 = vmax.xlane.f32.xlu0 %v403
    %v405 = vpop.xlane.xlu0 %404
    %v406 = vsel %vm384, %v383, -inf
    %407 = vmax.xlane.f32.xlu0 %v406
    %v408 = vpop.xlane.xlu0 %407
    %v409 = vsub.f32 %v376, %v387
    %v410 = vsub.f32 %v377, %v390
    %v411 = vsub.f32 %v378, %v393
    %v412 = vsub.f32 %v379, %v396
    %v413 = vsub.f32 %v380, %v399
    %v414 = vsub.f32 %v381, %v402
    %v415 = vsub.f32 %v382, %v405
    %v416 = vsub.f32 %v383, %v408
    %v417 = vmul.f32 %v409, 1.442695
    %v418 = vpow.pop %v417
    %v419 = vmul.f32 %v410, 1.442695
    %v420 = vpow.pop %v419
    %v421 = vmul.f32 %v411, 1.442695
    %v422 = vpow.pop %v421
    %v423 = vmul.f32 %v412, 1.442695
    %v424 = vpow.pop %v423
    %v425 = vmul.f32 %v413, 1.442695
    %v426 = vpow.pop %v425
    %v427 = vmul.f32 %v414, 1.442695
    %v428 = vpow.pop %v427
    %v429 = vmul.f32 %v415, 1.442695
    %v430 = vpow.pop %v429
    %v431 = vmul.f32 %v416, 1.442695
    %v432 = vpow.pop %v431
    %v433 = vsel %vm384, %v418, 0.0
    %434 = vadd.xlane.f32.xlu0 %v433
    %v435 = vpop.xlane.xlu0 %434
    %v436 = vsel %vm384, %v420, 0.0
    %437 = vadd.xlane.f32.xlu0 %v436
    %v438 = vpop.xlane.xlu0 %437
    %v439 = vsel %vm384, %v422, 0.0
    %440 = vadd.xlane.f32.xlu0 %v439
    %v441 = vpop.xlane.xlu0 %440
    %v442 = vsel %vm384, %v424, 0.0
    %443 = vadd.xlane.f32.xlu0 %v442
    %v444 = vpop.xlane.xlu0 %443
    %v445 = vsel %vm384, %v426, 0.0
    %446 = vadd.xlane.f32.xlu0 %v445
    %v447 = vpop.xlane.xlu0 %446
    %v448 = vsel %vm384, %v428, 0.0
    %449 = vadd.xlane.f32.xlu0 %v448
    %v450 = vpop.xlane.xlu0 %449
    %v451 = vsel %vm384, %v430, 0.0
    %452 = vadd.xlane.f32.xlu0 %v451
    %v453 = vpop.xlane.xlu0 %452
    %v454 = vsel %vm384, %v432, 0.0
    %455 = vadd.xlane.f32.xlu0 %v454
    %v456 = vpop.xlane.xlu0 %455
    %v457 = vrcp.pop %v435
    %v458 = vrcp.pop %v438
    %v459 = vrcp.pop %v441
    %v460 = vrcp.pop %v444
    %v461 = vrcp.pop %v447
    %v462 = vrcp.pop %v450
    %v463 = vrcp.pop %v453
    %v464 = vrcp.pop %v456
    %v465 = vmul.f32 %v418, %v457
    %v466 = vmul.f32 %v420, %v458
    %v467 = vmul.f32 %v422, %v459
    %v468 = vmul.f32 %v424, %v460
    %v469 = vmul.f32 %v426, %v461
    %v470 = vmul.f32 %v428, %v462
    %v471 = vmul.f32 %v430, %v463
    %v472 = vmul.f32 %v432, %v464
    %v473 = vlaneseq
    %v474 = vshrl.u32 %v473, 7
    %v475 = vsub.s32 0, %v474
    %v476 = vrot.slane %v48, %v475
    %v478 = vsel %vm384, %v465, 0
    %v481 = vsel %vm384, %v466, 0
    %v484 = vsel %vm384, %v467, 0
    %v487 = vsel %vm384, %v468, 0
    %v490 = vsel %vm384, %v469, 0
    %v493 = vsel %vm384, %v470, 0
    %v496 = vsel %vm384, %v471, 0
    %v499 = vsel %vm384, %v472, 0
    %501 = vmatprep.subr.mxu0 0.0
    %502 = vmatpush1.msra.mxu0 0.0
    %503 = vmatprep.subr.mxu0 0.0
    %504 = vmatpush1.msra.mxu0 0.0
    %505 = vmatprep.subr.mxu0 0.0
    %506 = vmatpush1.msra.mxu0 0.0
    %507 = vmatprep.subr.mxu0 0.0
    %508 = vmatpush1.msra.mxu0 0.0
    %509 = vmatprep.subr.mxu0 0.0
    %510 = vmatpush1.msra.mxu0 0.0
    %511 = vmatprep.subr.mxu0 0.0
    %512 = vmatpush1.msra.mxu0 0.0
    %513 = vmatprep.subr.mxu0 0.0
    %514 = vmatpush1.msra.mxu0 0.0
    %515 = vmatprep.subr.mxu0 0.0
    %516 = vmatpush1.msra.mxu0 0.0
    %517 = vmatprep.subr.mxu0 0.0
    %518 = vmatpush1.msra.mxu0 %v203
    %519 = vmatprep.subr.mxu0 0.0
    %520 = vmatpush1.msra.mxu0 %v198
    %521 = vmatprep.subr.mxu0 0.0
    %522 = vmatpush1.msra.mxu0 %v193
    %523 = vmatprep.subr.mxu0 0.0
    %524 = vmatpush1.msra.mxu0 %v188
    %525 = vmatprep.subr.mxu0 0.0
    %526 = vmatpush1.msra.mxu0 %v183
    %527 = vmatprep.subr.mxu0 0.0
    %528 = vmatpush1.msra.mxu0 %v178
    %529 = vmatprep.subr.mxu0 0.0
    %530 = vmatpush1.msra.mxu0 %v173
    %531 = vmatprep.subr.mxu0 0.0
    %532 = vmatpush1.msra.mxu0 %v168
    %533 = vmatprep.subr.mxu0 0.0
    %534 = vmatpush2.msra.mxu0 0.0
    %535 = vmatprep.subr.mxu0 0.0
    %536 = vmatpush2.msra.mxu0 0.0
    %537 = vmatprep.subr.mxu0 0.0
    %538 = vmatpush2.msra.mxu0 0.0
    %539 = vmatprep.subr.mxu0 0.0
    %540 = vmatpush2.msra.mxu0 0.0
    %541 = vmatprep.subr.mxu0 0.0
    %542 = vmatpush2.msra.mxu0 0.0
    %543 = vmatprep.subr.mxu0 0.0
    %544 = vmatpush2.msra.mxu0 0.0
    %545 = vmatprep.subr.mxu0 0.0
    %546 = vmatpush2.msra.mxu0 0.0
    %547 = vmatprep.subr.mxu0 0.0
    %548 = vmatpush2.msra.mxu0 0.0
    %549 = vmatprep.subr.mxu0 0.0
    %550 = vmatpush2.msra.mxu0 0.0
    %551 = vmatprep.subr.mxu0 0.0
    %552 = vmatpush2.msra.mxu0 0.0
    %553 = vmatprep.subr.mxu0 0.0
    %554 = vmatpush2.msra.mxu0 0.0
    %555 = vmatprep.subr.mxu0 0.0
    %556 = vmatpush2.msra.mxu0 0.0
    %557 = vmatprep.subr.mxu0 0.0
    %558 = vmatpush2.msra.mxu0 0.0
    %559 = vmatprep.subr.mxu0 0.0
    %560 = vmatpush2.msra.mxu0 0.0
    %561 = vmatprep.subr.mxu0 0.0
    %562 = vmatpush2.msra.mxu0 0.0
    %563 = vmatprep.subr.mxu0 0.0
    %564 = vmatpush2.msra.mxu0 0.0
    %565 = vmatprep.mubr.f32.mxu0 0.0
    %566 = vmatmul.mubr.f32.gmra.mxu0 %v478
    %v567 = vpop.f32.mrf.mxu0
    %v568 = vadd.f32 %v476, %v567
    %v569 = vpop.f32.mrf.mxu0
    %570 = vmatprep.mubr.f32.mxu0 0.0
    %571 = vmatmul.mubr.f32.gmra.mxu0 %v481
    %v572 = vpop.f32.mrf.mxu0
    %v573 = vadd.f32 %v476, %v572
    %v574 = vpop.f32.mrf.mxu0
    %575 = vmatprep.mubr.f32.mxu0 0.0
    %576 = vmatmul.mubr.f32.gmra.mxu0 %v484
    %v577 = vpop.f32.mrf.mxu0
    %v578 = vadd.f32 %v476, %v577
    %v579 = vpop.f32.mrf.mxu0
    %580 = vmatprep.mubr.f32.mxu0 0.0
    %581 = vmatmul.mubr.f32.gmra.mxu0 %v487
    %v582 = vpop.f32.mrf.mxu0
    %v583 = vadd.f32 %v476, %v582
    %v584 = vpop.f32.mrf.mxu0
    %585 = vmatprep.mubr.f32.mxu0 0.0
    %586 = vmatmul.mubr.f32.gmra.mxu0 %v490
    %v587 = vpop.f32.mrf.mxu0
    %v588 = vadd.f32 %v476, %v587
    %v589 = vpop.f32.mrf.mxu0
    %590 = vmatprep.mubr.f32.mxu0 0.0
    %591 = vmatmul.mubr.f32.gmra.mxu0 %v493
    %v592 = vpop.f32.mrf.mxu0
    %v593 = vadd.f32 %v476, %v592
    %v594 = vpop.f32.mrf.mxu0
    %595 = vmatprep.mubr.f32.mxu0 0.0
    %596 = vmatmul.mubr.f32.gmra.mxu0 %v496
    %v597 = vpop.f32.mrf.mxu0
    %v598 = vadd.f32 %v476, %v597
    %v599 = vpop.f32.mrf.mxu0
    %600 = vmatprep.mubr.f32.mxu0 0.0
    %601 = vmatmul.mubr.f32.gmra.mxu0 %v499
    %v602 = vpop.f32.mrf.mxu0
    %v603 = vadd.f32 %v476, %v602
    %v604 = vpop.f32.mrf.mxu0
    %605 = vdwg.mxu0
    %v606 = vmul.f32 %v568, %v568
    %v607 = vmul.f32 %v573, %v573
    %v608 = vmul.f32 %v578, %v578
    %v609 = vmul.f32 %v583, %v583
    %v610 = vmul.f32 %v588, %v588
    %v611 = vmul.f32 %v593, %v593
    %v612 = vmul.f32 %v598, %v598
    %v613 = vmul.f32 %v603, %v603
    %v614 = vsel %vm206, %v606, 0.0
    %615 = vadd.xlane.f32.xlu0 %v614
    %v616 = vpop.xlane.xlu0 %615
    %v617 = vsel %vm206, %v607, 0.0
    %618 = vadd.xlane.f32.xlu0 %v617
    %v619 = vpop.xlane.xlu0 %618
    %v620 = vsel %vm206, %v608, 0.0
    %621 = vadd.xlane.f32.xlu0 %v620
    %v622 = vpop.xlane.xlu0 %621
    %v623 = vsel %vm206, %v609, 0.0
    %624 = vadd.xlane.f32.xlu0 %v623
    %v625 = vpop.xlane.xlu0 %624
    %v626 = vsel %vm206, %v610, 0.0
    %627 = vadd.xlane.f32.xlu0 %v626
    %v628 = vpop.xlane.xlu0 %627
    %v629 = vsel %vm206, %v611, 0.0
    %630 = vadd.xlane.f32.xlu0 %v629
    %v631 = vpop.xlane.xlu0 %630
    %v632 = vsel %vm206, %v612, 0.0
    %633 = vadd.xlane.f32.xlu0 %v632
    %v634 = vpop.xlane.xlu0 %633
    %v635 = vsel %vm206, %v613, 0.0
    %636 = vadd.xlane.f32.xlu0 %v635
    %v637 = vpop.xlane.xlu0 %636
    %v638 = vmax.f32 %v616, 1e-24
    %v639 = vmax.f32 %v619, 1e-24
    %v640 = vmax.f32 %v622, 1e-24
    %v641 = vmax.f32 %v625, 1e-24
    %v642 = vmax.f32 %v628, 1e-24
    %v643 = vmax.f32 %v631, 1e-24
    %v644 = vmax.f32 %v634, 1e-24
    %v645 = vmax.f32 %v637, 1e-24
    %v646 = vrsqrt.pop %v638
    %v647 = vrsqrt.pop %v639
    %v648 = vrsqrt.pop %v640
    %v649 = vrsqrt.pop %v641
    %v650 = vrsqrt.pop %v642
    %v651 = vrsqrt.pop %v643
    %v652 = vrsqrt.pop %v644
    %v653 = vrsqrt.pop %v645
    %v654 = vmul.f32 %v568, %v646
    %v655 = vmul.f32 %v573, %v647
    %v656 = vmul.f32 %v578, %v648
    %v657 = vmul.f32 %v583, %v649
    %v658 = vmul.f32 %v588, %v650
    %v659 = vmul.f32 %v593, %v651
    %v660 = vmul.f32 %v598, %v652
    %v661 = vmul.f32 %v603, %v653
    %v662 = vmax.f32 %v654, 0.0
    %v663 = vmax.f32 %v655, 0.0
    %v664 = vmax.f32 %v656, 0.0
    %v665 = vmax.f32 %v657, 0.0
    %v666 = vmax.f32 %v658, 0.0
    %v667 = vmax.f32 %v659, 0.0
    %v668 = vmax.f32 %v660, 0.0
    %v669 = vmax.f32 %v661, 0.0
    %v670 = vlaneseq
    %v671 = vshrl.u32 %v670, 7
    %v672 = vsub.s32 0, %v671
    %v673 = vrot.slane %v67, %v672
    %v675 = vsel %vm206, %v662, 0
    %v678 = vsel %vm206, %v663, 0
    %v681 = vsel %vm206, %v664, 0
    %v684 = vsel %vm206, %v665, 0
    %v687 = vsel %vm206, %v666, 0
    %v690 = vsel %vm206, %v667, 0
    %v693 = vsel %vm206, %v668, 0
    %v696 = vsel %vm206, %v669, 0
    %698 = vmatprep.subr.mxu0 0.0
    %699 = vmatpush1.msra.mxu0 0.0
    %700 = vmatprep.subr.mxu0 0.0
    %701 = vmatpush1.msra.mxu0 0.0
    %702 = vmatprep.subr.mxu0 0.0
    %703 = vmatpush1.msra.mxu0 0.0
    %704 = vmatprep.subr.mxu0 0.0
    %705 = vmatpush1.msra.mxu0 0.0
    %706 = vmatprep.subr.mxu0 0.0
    %707 = vmatpush1.msra.mxu0 0.0
    %708 = vmatprep.subr.mxu0 0.0
    %709 = vmatpush1.msra.mxu0 0.0
    %710 = vmatprep.subr.mxu0 0.0
    %711 = vmatpush1.msra.mxu0 0.0
    %712 = vmatprep.subr.mxu0 0.0
    %713 = vmatpush1.msra.mxu0 0.0
    %714 = vmatprep.subr.mxu0 0.0
    %715 = vmatpush1.msra.mxu0 0.0
    %716 = vmatprep.subr.mxu0 0.0
    %717 = vmatpush1.msra.mxu0 0.0
    %718 = vmatprep.subr.mxu0 0.0
    %719 = vmatpush1.msra.mxu0 0.0
    %720 = vmatprep.subr.mxu0 0.0
    %721 = vmatpush1.msra.mxu0 0.0
    %722 = vmatprep.subr.mxu0 0.0
    %723 = vmatpush1.msra.mxu0 %v58
    %724 = vmatprep.subr.mxu0 0.0
    %725 = vmatpush1.msra.mxu0 %v57
    %726 = vmatprep.subr.mxu0 0.0
    %727 = vmatpush1.msra.mxu0 %v56
    %728 = vmatprep.subr.mxu0 0.0
    %729 = vmatpush1.msra.mxu0 %v55
    %730 = vmatprep.subr.mxu0 0.0
    %731 = vmatpush2.msra.mxu0 0.0
    %732 = vmatprep.subr.mxu0 0.0
    %733 = vmatpush2.msra.mxu0 0.0
    %734 = vmatprep.subr.mxu0 0.0
    %735 = vmatpush2.msra.mxu0 0.0
    %736 = vmatprep.subr.mxu0 0.0
    %737 = vmatpush2.msra.mxu0 0.0
    %738 = vmatprep.subr.mxu0 0.0
    %739 = vmatpush2.msra.mxu0 0.0
    %740 = vmatprep.subr.mxu0 0.0
    %741 = vmatpush2.msra.mxu0 0.0
    %742 = vmatprep.subr.mxu0 0.0
    %743 = vmatpush2.msra.mxu0 0.0
    %744 = vmatprep.subr.mxu0 0.0
    %745 = vmatpush2.msra.mxu0 0.0
    %746 = vmatprep.subr.mxu0 0.0
    %747 = vmatpush2.msra.mxu0 0.0
    %748 = vmatprep.subr.mxu0 0.0
    %749 = vmatpush2.msra.mxu0 0.0
    %750 = vmatprep.subr.mxu0 0.0
    %751 = vmatpush2.msra.mxu0 0.0
    %752 = vmatprep.subr.mxu0 0.0
    %753 = vmatpush2.msra.mxu0 0.0
    %754 = vmatprep.subr.mxu0 0.0
    %755 = vmatpush2.msra.mxu0 0.0
    %756 = vmatprep.subr.mxu0 0.0
    %757 = vmatpush2.msra.mxu0 0.0
    %758 = vmatprep.subr.mxu0 0.0
    %759 = vmatpush2.msra.mxu0 0.0
    %760 = vmatprep.subr.mxu0 0.0
    %761 = vmatpush2.msra.mxu0 0.0
    %762 = vmatprep.mubr.f32.mxu0 0.0
    %763 = vmatmul.mubr.f32.gmra.mxu0 %v675
    %v764 = vpop.f32.mrf.mxu0
    %v765 = vadd.f32 %v673, %v764
    %v766 = vpop.f32.mrf.mxu0
    %767 = vmatprep.mubr.f32.mxu0 0.0
    %768 = vmatmul.mubr.f32.gmra.mxu0 %v678
    %v769 = vpop.f32.mrf.mxu0
    %v770 = vadd.f32 %v673, %v769
    %v771 = vpop.f32.mrf.mxu0
    %772 = vmatprep.mubr.f32.mxu0 0.0
    %773 = vmatmul.mubr.f32.gmra.mxu0 %v681
    %v774 = vpop.f32.mrf.mxu0
    %v775 = vadd.f32 %v673, %v774
    %v776 = vpop.f32.mrf.mxu0
    %777 = vmatprep.mubr.f32.mxu0 0.0
    %778 = vmatmul.mubr.f32.gmra.mxu0 %v684
    %v779 = vpop.f32.mrf.mxu0
    %v780 = vadd.f32 %v673, %v779
    %v781 = vpop.f32.mrf.mxu0
    %782 = vmatprep.mubr.f32.mxu0 0.0
    %783 = vmatmul.mubr.f32.gmra.mxu0 %v687
    %v784 = vpop.f32.mrf.mxu0
    %v785 = vadd.f32 %v673, %v784
    %v786 = vpop.f32.mrf.mxu0
    %787 = vmatprep.mubr.f32.mxu0 0.0
    %788 = vmatmul.mubr.f32.gmra.mxu0 %v690
    %v789 = vpop.f32.mrf.mxu0
    %v790 = vadd.f32 %v673, %v789
    %v791 = vpop.f32.mrf.mxu0
    %792 = vmatprep.mubr.f32.mxu0 0.0
    %793 = vmatmul.mubr.f32.gmra.mxu0 %v693
    %v794 = vpop.f32.mrf.mxu0
    %v795 = vadd.f32 %v673, %v794
    %v796 = vpop.f32.mrf.mxu0
    %797 = vmatprep.mubr.f32.mxu0 0.0
    %798 = vmatmul.mubr.f32.gmra.mxu0 %v696
    %v799 = vpop.f32.mrf.mxu0
    %v800 = vadd.f32 %v673, %v799
    %v801 = vpop.f32.mrf.mxu0
    %802 = vdwg.mxu0
    %803 = vmatprep.subr.mxu0 0.0
    %804 = vmatpush1.msra.mxu0 0.0
    %805 = vmatprep.subr.mxu0 0.0
    %806 = vmatpush1.msra.mxu0 0.0
    %807 = vmatprep.subr.mxu0 0.0
    %808 = vmatpush1.msra.mxu0 0.0
    %809 = vmatprep.subr.mxu0 0.0
    %810 = vmatpush1.msra.mxu0 0.0
    %811 = vmatprep.subr.mxu0 0.0
    %812 = vmatpush1.msra.mxu0 0.0
    %813 = vmatprep.subr.mxu0 0.0
    %814 = vmatpush1.msra.mxu0 0.0
    %815 = vmatprep.subr.mxu0 0.0
    %816 = vmatpush1.msra.mxu0 0.0
    %817 = vmatprep.subr.mxu0 0.0
    %818 = vmatpush1.msra.mxu0 0.0
    %819 = vmatprep.subr.mxu0 0.0
    %820 = vmatpush1.msra.mxu0 0.0
    %821 = vmatprep.subr.mxu0 0.0
    %822 = vmatpush1.msra.mxu0 0.0
    %823 = vmatprep.subr.mxu0 0.0
    %824 = vmatpush1.msra.mxu0 0.0
    %825 = vmatprep.subr.mxu0 0.0
    %826 = vmatpush1.msra.mxu0 0.0
    %827 = vmatprep.subr.mxu0 0.0
    %828 = vmatpush1.msra.mxu0 %v41
    %829 = vmatprep.subr.mxu0 0.0
    %830 = vmatpush1.msra.mxu0 %v40
    %831 = vmatprep.subr.mxu0 0.0
    %832 = vmatpush1.msra.mxu0 %v39
    %833 = vmatprep.subr.mxu0 0.0
    %834 = vmatpush1.msra.mxu0 %v38
    %835 = vmatprep.subr.mxu0 0.0
    %836 = vmatpush2.msra.mxu0 0.0
    %837 = vmatprep.subr.mxu0 0.0
    %838 = vmatpush2.msra.mxu0 0.0
    %839 = vmatprep.subr.mxu0 0.0
    %840 = vmatpush2.msra.mxu0 0.0
    %841 = vmatprep.subr.mxu0 0.0
    %842 = vmatpush2.msra.mxu0 0.0
    %843 = vmatprep.subr.mxu0 0.0
    %844 = vmatpush2.msra.mxu0 0.0
    %845 = vmatprep.subr.mxu0 0.0
    %846 = vmatpush2.msra.mxu0 0.0
    %847 = vmatprep.subr.mxu0 0.0
    %848 = vmatpush2.msra.mxu0 0.0
    %849 = vmatprep.subr.mxu0 0.0
    %850 = vmatpush2.msra.mxu0 0.0
    %851 = vmatprep.subr.mxu0 0.0
    %852 = vmatpush2.msra.mxu0 0.0
    %853 = vmatprep.subr.mxu0 0.0
    %854 = vmatpush2.msra.mxu0 0.0
    %855 = vmatprep.subr.mxu0 0.0
    %856 = vmatpush2.msra.mxu0 0.0
    %857 = vmatprep.subr.mxu0 0.0
    %858 = vmatpush2.msra.mxu0 0.0
    %859 = vmatprep.subr.mxu0 0.0
    %860 = vmatpush2.msra.mxu0 0.0
    %861 = vmatprep.subr.mxu0 0.0
    %862 = vmatpush2.msra.mxu0 0.0
    %863 = vmatprep.subr.mxu0 0.0
    %864 = vmatpush2.msra.mxu0 0.0
    %865 = vmatprep.subr.mxu0 0.0
    %866 = vmatpush2.msra.mxu0 0.0
    %867 = vmatprep.mubr.f32.mxu0 0.0
    %868 = vmatmul.mubr.f32.gmra.mxu0 %v675
    %v869 = vpop.f32.mrf.mxu0
    %v870 = vadd.f32 0.0, %v869
    %v871 = vpop.f32.mrf.mxu0
    %872 = vmatprep.mubr.f32.mxu0 0.0
    %873 = vmatmul.mubr.f32.gmra.mxu0 %v678
    %v874 = vpop.f32.mrf.mxu0
    %v875 = vadd.f32 0.0, %v874
    %v876 = vpop.f32.mrf.mxu0
    %877 = vmatprep.mubr.f32.mxu0 0.0
    %878 = vmatmul.mubr.f32.gmra.mxu0 %v681
    %v879 = vpop.f32.mrf.mxu0
    %v880 = vadd.f32 0.0, %v879
    %v881 = vpop.f32.mrf.mxu0
    %882 = vmatprep.mubr.f32.mxu0 0.0
    %883 = vmatmul.mubr.f32.gmra.mxu0 %v684
    %v884 = vpop.f32.mrf.mxu0
    %v885 = vadd.f32 0.0, %v884
    %v886 = vpop.f32.mrf.mxu0
    %887 = vmatprep.mubr.f32.mxu0 0.0
    %888 = vmatmul.mubr.f32.gmra.mxu0 %v687
    %v889 = vpop.f32.mrf.mxu0
    %v890 = vadd.f32 0.0, %v889
    %v891 = vpop.f32.mrf.mxu0
    %892 = vmatprep.mubr.f32.mxu0 0.0
    %893 = vmatmul.mubr.f32.gmra.mxu0 %v690
    %v894 = vpop.f32.mrf.mxu0
    %v895 = vadd.f32 0.0, %v894
    %v896 = vpop.f32.mrf.mxu0
    %897 = vmatprep.mubr.f32.mxu0 0.0
    %898 = vmatmul.mubr.f32.gmra.mxu0 %v693
    %v899 = vpop.f32.mrf.mxu0
    %v900 = vadd.f32 0.0, %v899
    %v901 = vpop.f32.mrf.mxu0
    %902 = vmatprep.mubr.f32.mxu0 0.0
    %903 = vmatmul.mubr.f32.gmra.mxu0 %v696
    %v904 = vpop.f32.mrf.mxu0
    %v905 = vadd.f32 0.0, %v904
    %v906 = vpop.f32.mrf.mxu0
    %907 = vdwg.mxu0
    %v909 = vsel %vm206, %v49, 0
    %v912 = vsel %vm206, %v870, 0
    %v915 = vsel %vm206, %v875, 0
    %v918 = vsel %vm206, %v880, 0
    %v921 = vsel %vm206, %v885, 0
    %v924 = vsel %vm206, %v890, 0
    %v927 = vsel %vm206, %v895, 0
    %v930 = vsel %vm206, %v900, 0
    %v933 = vsel %vm206, %v905, 0
    %935 = vmatprep.subr.mxu0 0.0
    %936 = vmatpush1.xpose.msra.mxu0 0.0
    %937 = vmatprep.subr.mxu0 0.0
    %938 = vmatpush1.xpose.msra.mxu0 0.0
    %939 = vmatprep.subr.mxu0 0.0
    %940 = vmatpush1.xpose.msra.mxu0 0.0
    %941 = vmatprep.subr.mxu0 0.0
    %942 = vmatpush1.xpose.msra.mxu0 0.0
    %943 = vmatprep.subr.mxu0 0.0
    %944 = vmatpush1.xpose.msra.mxu0 0.0
    %945 = vmatprep.subr.mxu0 0.0
    %946 = vmatpush1.xpose.msra.mxu0 0.0
    %947 = vmatprep.subr.mxu0 0.0
    %948 = vmatpush1.xpose.msra.mxu0 0.0
    %949 = vmatprep.subr.mxu0 0.0
    %950 = vmatpush1.xpose.msra.mxu0 0.0
    %951 = vmatprep.subr.mxu0 0.0
    %952 = vmatpush1.xpose.msra.mxu0 %v933
    %953 = vmatprep.subr.mxu0 0.0
    %954 = vmatpush1.xpose.msra.mxu0 %v930
    %955 = vmatprep.subr.mxu0 0.0
    %956 = vmatpush1.xpose.msra.mxu0 %v927
    %957 = vmatprep.subr.mxu0 0.0
    %958 = vmatpush1.xpose.msra.mxu0 %v924
    %959 = vmatprep.subr.mxu0 0.0
    %960 = vmatpush1.xpose.msra.mxu0 %v921
    %961 = vmatprep.subr.mxu0 0.0
    %962 = vmatpush1.xpose.msra.mxu0 %v918
    %963 = vmatprep.subr.mxu0 0.0
    %964 = vmatpush1.xpose.msra.mxu0 %v915
    %965 = vmatprep.subr.mxu0 0.0
    %966 = vmatpush1.xpose.msra.mxu0 %v912
    %967 = vmatprep.subr.mxu0 0.0
    %968 = vmatpush2.xpose.msra.mxu0 0.0
    %969 = vmatprep.subr.mxu0 0.0
    %970 = vmatpush2.xpose.msra.mxu0 0.0
    %971 = vmatprep.subr.mxu0 0.0
    %972 = vmatpush2.xpose.msra.mxu0 0.0
    %973 = vmatprep.subr.mxu0 0.0
    %974 = vmatpush2.xpose.msra.mxu0 0.0
    %975 = vmatprep.subr.mxu0 0.0
    %976 = vmatpush2.xpose.msra.mxu0 0.0
    %977 = vmatprep.subr.mxu0 0.0
    %978 = vmatpush2.xpose.msra.mxu0 0.0
    %979 = vmatprep.subr.mxu0 0.0
    %980 = vmatpush2.xpose.msra.mxu0 0.0
    %981 = vmatprep.subr.mxu0 0.0
    %982 = vmatpush2.xpose.msra.mxu0 0.0
    %983 = vmatprep.subr.mxu0 0.0
    %984 = vmatpush2.xpose.msra.mxu0 0.0
    %985 = vmatprep.subr.mxu0 0.0
    %986 = vmatpush2.xpose.msra.mxu0 0.0
    %987 = vmatprep.subr.mxu0 0.0
    %988 = vmatpush2.xpose.msra.mxu0 0.0
    %989 = vmatprep.subr.mxu0 0.0
    %990 = vmatpush2.xpose.msra.mxu0 0.0
    %991 = vmatprep.subr.mxu0 0.0
    %992 = vmatpush2.xpose.msra.mxu0 0.0
    %993 = vmatprep.subr.mxu0 0.0
    %994 = vmatpush2.xpose.msra.mxu0 0.0
    %995 = vmatprep.subr.mxu0 0.0
    %996 = vmatpush2.xpose.msra.mxu0 0.0
    %997 = vmatprep.subr.mxu0 0.0
    %998 = vmatpush2.xpose.msra.mxu0 0.0
    %999 = vmatprep.mubr.f32.mxu0 0.0
    %1000 = vmatmul.mubr.f32.gmra.mxu0 %v909
    %v1001 = vpop.f32.mrf.mxu0
    %v1002 = vadd.f32 0.0, %v1001
    %v1003 = vpop.f32.mrf.mxu0
    %1004 = vdwg.mxu0
    %v1005 = vlaneseq
    %v1006 = vshrl.u32 %v1005, 7
    %v1007 = vsub.s32 0, %v1006
    %v1008 = vrot.slane %v50, %v1007
    %v1009 = vmul.f32 %v870, %v1008
    %v1010 = vmul.f32 %v875, %v1008
    %v1011 = vmul.f32 %v880, %v1008
    %v1012 = vmul.f32 %v885, %v1008
    %v1013 = vmul.f32 %v890, %v1008
    %v1014 = vmul.f32 %v895, %v1008
    %v1015 = vmul.f32 %v900, %v1008
    %v1016 = vmul.f32 %v905, %v1008
    %v1017 = vsel %vm206, %v1009, 0.0
    %1018 = vadd.xlane.f32.xlu0 %v1017
    %v1019 = vpop.xlane.xlu0 %1018
    %v1020 = vsel %vm206, %v1010, 0.0
    %1021 = vadd.xlane.f32.xlu0 %v1020
    %v1022 = vpop.xlane.xlu0 %1021
    %v1023 = vsel %vm206, %v1011, 0.0
    %1024 = vadd.xlane.f32.xlu0 %v1023
    %v1025 = vpop.xlane.xlu0 %1024
    %v1026 = vsel %vm206, %v1012, 0.0
    %1027 = vadd.xlane.f32.xlu0 %v1026
    %v1028 = vpop.xlane.xlu0 %1027
    %v1029 = vsel %vm206, %v1013, 0.0
    %1030 = vadd.xlane.f32.xlu0 %v1029
    %v1031 = vpop.xlane.xlu0 %1030
    %v1032 = vsel %vm206, %v1014, 0.0
    %1033 = vadd.xlane.f32.xlu0 %v1032
    %v1034 = vpop.xlane.xlu0 %1033
    %v1035 = vsel %vm206, %v1015, 0.0
    %1036 = vadd.xlane.f32.xlu0 %v1035
    %v1037 = vpop.xlane.xlu0 %1036
    %v1038 = vsel %vm206, %v1016, 0.0
    %1039 = vadd.xlane.f32.xlu0 %v1038
    %v1040 = vpop.xlane.xlu0 %1039
    %v1041 = vlaneseq
    %v1042 = vshrl.u32 %v1041, 7
    %v1043 = vsub.s32 0, %v1042
    %v1044 = vrot.slane %v1002, %v1043
    %v1045 = vadd.f32 %v1019, %v1044
    %v1046 = vadd.f32 %v1022, %v1044
    %v1047 = vadd.f32 %v1025, %v1044
    %v1048 = vadd.f32 %v1028, %v1044
    %v1049 = vadd.f32 %v1031, %v1044
    %v1050 = vadd.f32 %v1034, %v1044
    %v1051 = vadd.f32 %v1037, %v1044
    %v1052 = vadd.f32 %v1040, %v1044
    %vm1053 = vcmp.gt.f32.partialorder %v1045, 0.0
    %vm1054 = vcmp.gt.f32.partialorder %v1046, 0.0
    %vm1055 = vcmp.gt.f32.partialorder %v1047, 0.0
    %vm1056 = vcmp.gt.f32.partialorder %v1048, 0.0
    %vm1057 = vcmp.gt.f32.partialorder %v1049, 0.0
    %vm1058 = vcmp.gt.f32.partialorder %v1050, 0.0
    %vm1059 = vcmp.gt.f32.partialorder %v1051, 0.0
    %vm1060 = vcmp.gt.f32.partialorder %v1052, 0.0
    %v1061 = vmul.f32 %v1045, 0.2
    %v1062 = vmul.f32 %v1046, 0.2
    %v1063 = vmul.f32 %v1047, 0.2
    %v1064 = vmul.f32 %v1048, 0.2
    %v1065 = vmul.f32 %v1049, 0.2
    %v1066 = vmul.f32 %v1050, 0.2
    %v1067 = vmul.f32 %v1051, 0.2
    %v1068 = vmul.f32 %v1052, 0.2
    %v1069 = vsel %vm1053, %v1045, %v1061
    %v1070 = vsel %vm1054, %v1046, %v1062
    %v1071 = vsel %vm1055, %v1047, %v1063
    %v1072 = vsel %vm1056, %v1048, %v1064
    %v1073 = vsel %vm1057, %v1049, %v1065
    %v1074 = vsel %vm1058, %v1050, %v1066
    %v1075 = vsel %vm1059, %v1051, %v1067
    %v1076 = vsel %vm1060, %v1052, %v1068
    %v1077 = vadd.f32 %v1069, %v28
    %v1078 = vadd.f32 %v1070, %v29
    %v1079 = vadd.f32 %v1071, %v30
    %v1080 = vadd.f32 %v1072, %v31
    %v1081 = vadd.f32 %v1073, %v32
    %v1082 = vadd.f32 %v1074, %v33
    %v1083 = vadd.f32 %v1075, %v34
    %v1084 = vadd.f32 %v1076, %v35
    %v1085 = vsel %vm384, %v1077, -inf
    %1086 = vmax.xlane.f32.xlu0 %v1085
    %v1087 = vpop.xlane.xlu0 %1086
    %v1088 = vsel %vm384, %v1078, -inf
    %1089 = vmax.xlane.f32.xlu0 %v1088
    %v1090 = vpop.xlane.xlu0 %1089
    %v1091 = vsel %vm384, %v1079, -inf
    %1092 = vmax.xlane.f32.xlu0 %v1091
    %v1093 = vpop.xlane.xlu0 %1092
    %v1094 = vsel %vm384, %v1080, -inf
    %1095 = vmax.xlane.f32.xlu0 %v1094
    %v1096 = vpop.xlane.xlu0 %1095
    %v1097 = vsel %vm384, %v1081, -inf
    %1098 = vmax.xlane.f32.xlu0 %v1097
    %v1099 = vpop.xlane.xlu0 %1098
    %v1100 = vsel %vm384, %v1082, -inf
    %1101 = vmax.xlane.f32.xlu0 %v1100
    %v1102 = vpop.xlane.xlu0 %1101
    %v1103 = vsel %vm384, %v1083, -inf
    %1104 = vmax.xlane.f32.xlu0 %v1103
    %v1105 = vpop.xlane.xlu0 %1104
    %v1106 = vsel %vm384, %v1084, -inf
    %1107 = vmax.xlane.f32.xlu0 %v1106
    %v1108 = vpop.xlane.xlu0 %1107
    %v1109 = vsub.f32 %v1077, %v1087
    %v1110 = vsub.f32 %v1078, %v1090
    %v1111 = vsub.f32 %v1079, %v1093
    %v1112 = vsub.f32 %v1080, %v1096
    %v1113 = vsub.f32 %v1081, %v1099
    %v1114 = vsub.f32 %v1082, %v1102
    %v1115 = vsub.f32 %v1083, %v1105
    %v1116 = vsub.f32 %v1084, %v1108
    %v1117 = vmul.f32 %v1109, 1.442695
    %v1118 = vpow.pop %v1117
    %v1119 = vmul.f32 %v1110, 1.442695
    %v1120 = vpow.pop %v1119
    %v1121 = vmul.f32 %v1111, 1.442695
    %v1122 = vpow.pop %v1121
    %v1123 = vmul.f32 %v1112, 1.442695
    %v1124 = vpow.pop %v1123
    %v1125 = vmul.f32 %v1113, 1.442695
    %v1126 = vpow.pop %v1125
    %v1127 = vmul.f32 %v1114, 1.442695
    %v1128 = vpow.pop %v1127
    %v1129 = vmul.f32 %v1115, 1.442695
    %v1130 = vpow.pop %v1129
    %v1131 = vmul.f32 %v1116, 1.442695
    %v1132 = vpow.pop %v1131
    %v1133 = vsel %vm384, %v1118, 0.0
    %1134 = vadd.xlane.f32.xlu0 %v1133
    %v1135 = vpop.xlane.xlu0 %1134
    %v1136 = vsel %vm384, %v1120, 0.0
    %1137 = vadd.xlane.f32.xlu0 %v1136
    %v1138 = vpop.xlane.xlu0 %1137
    %v1139 = vsel %vm384, %v1122, 0.0
    %1140 = vadd.xlane.f32.xlu0 %v1139
    %v1141 = vpop.xlane.xlu0 %1140
    %v1142 = vsel %vm384, %v1124, 0.0
    %1143 = vadd.xlane.f32.xlu0 %v1142
    %v1144 = vpop.xlane.xlu0 %1143
    %v1145 = vsel %vm384, %v1126, 0.0
    %1146 = vadd.xlane.f32.xlu0 %v1145
    %v1147 = vpop.xlane.xlu0 %1146
    %v1148 = vsel %vm384, %v1128, 0.0
    %1149 = vadd.xlane.f32.xlu0 %v1148
    %v1150 = vpop.xlane.xlu0 %1149
    %v1151 = vsel %vm384, %v1130, 0.0
    %1152 = vadd.xlane.f32.xlu0 %v1151
    %v1153 = vpop.xlane.xlu0 %1152
    %v1154 = vsel %vm384, %v1132, 0.0
    %1155 = vadd.xlane.f32.xlu0 %v1154
    %v1156 = vpop.xlane.xlu0 %1155
    %v1157 = vrcp.pop %v1135
    %v1158 = vrcp.pop %v1138
    %v1159 = vrcp.pop %v1141
    %v1160 = vrcp.pop %v1144
    %v1161 = vrcp.pop %v1147
    %v1162 = vrcp.pop %v1150
    %v1163 = vrcp.pop %v1153
    %v1164 = vrcp.pop %v1156
    %v1165 = vmul.f32 %v1118, %v1157
    %v1166 = vmul.f32 %v1120, %v1158
    %v1167 = vmul.f32 %v1122, %v1159
    %v1168 = vmul.f32 %v1124, %v1160
    %v1169 = vmul.f32 %v1126, %v1161
    %v1170 = vmul.f32 %v1128, %v1162
    %v1171 = vmul.f32 %v1130, %v1163
    %v1172 = vmul.f32 %v1132, %v1164
    %v1173 = vlaneseq
    %v1174 = vshrl.u32 %v1173, 7
    %v1175 = vsub.s32 0, %v1174
    %v1176 = vrot.slane %v51, %v1175
    %v1178 = vsel %vm384, %v1165, 0
    %v1181 = vsel %vm384, %v1166, 0
    %v1184 = vsel %vm384, %v1167, 0
    %v1187 = vsel %vm384, %v1168, 0
    %v1190 = vsel %vm384, %v1169, 0
    %v1193 = vsel %vm384, %v1170, 0
    %v1196 = vsel %vm384, %v1171, 0
    %v1199 = vsel %vm384, %v1172, 0
    %1201 = vmatprep.subr.mxu0 0.0
    %1202 = vmatpush1.msra.mxu0 0.0
    %1203 = vmatprep.subr.mxu0 0.0
    %1204 = vmatpush1.msra.mxu0 0.0
    %1205 = vmatprep.subr.mxu0 0.0
    %1206 = vmatpush1.msra.mxu0 0.0
    %1207 = vmatprep.subr.mxu0 0.0
    %1208 = vmatpush1.msra.mxu0 0.0
    %1209 = vmatprep.subr.mxu0 0.0
    %1210 = vmatpush1.msra.mxu0 0.0
    %1211 = vmatprep.subr.mxu0 0.0
    %1212 = vmatpush1.msra.mxu0 0.0
    %1213 = vmatprep.subr.mxu0 0.0
    %1214 = vmatpush1.msra.mxu0 0.0
    %1215 = vmatprep.subr.mxu0 0.0
    %1216 = vmatpush1.msra.mxu0 0.0
    %1217 = vmatprep.subr.mxu0 0.0
    %1218 = vmatpush1.msra.mxu0 %v905
    %1219 = vmatprep.subr.mxu0 0.0
    %1220 = vmatpush1.msra.mxu0 %v900
    %1221 = vmatprep.subr.mxu0 0.0
    %1222 = vmatpush1.msra.mxu0 %v895
    %1223 = vmatprep.subr.mxu0 0.0
    %1224 = vmatpush1.msra.mxu0 %v890
    %1225 = vmatprep.subr.mxu0 0.0
    %1226 = vmatpush1.msra.mxu0 %v885
    %1227 = vmatprep.subr.mxu0 0.0
    %1228 = vmatpush1.msra.mxu0 %v880
    %1229 = vmatprep.subr.mxu0 0.0
    %1230 = vmatpush1.msra.mxu0 %v875
    %1231 = vmatprep.subr.mxu0 0.0
    %1232 = vmatpush1.msra.mxu0 %v870
    %1233 = vmatprep.subr.mxu0 0.0
    %1234 = vmatpush2.msra.mxu0 0.0
    %1235 = vmatprep.subr.mxu0 0.0
    %1236 = vmatpush2.msra.mxu0 0.0
    %1237 = vmatprep.subr.mxu0 0.0
    %1238 = vmatpush2.msra.mxu0 0.0
    %1239 = vmatprep.subr.mxu0 0.0
    %1240 = vmatpush2.msra.mxu0 0.0
    %1241 = vmatprep.subr.mxu0 0.0
    %1242 = vmatpush2.msra.mxu0 0.0
    %1243 = vmatprep.subr.mxu0 0.0
    %1244 = vmatpush2.msra.mxu0 0.0
    %1245 = vmatprep.subr.mxu0 0.0
    %1246 = vmatpush2.msra.mxu0 0.0
    %1247 = vmatprep.subr.mxu0 0.0
    %1248 = vmatpush2.msra.mxu0 0.0
    %1249 = vmatprep.subr.mxu0 0.0
    %1250 = vmatpush2.msra.mxu0 0.0
    %1251 = vmatprep.subr.mxu0 0.0
    %1252 = vmatpush2.msra.mxu0 0.0
    %1253 = vmatprep.subr.mxu0 0.0
    %1254 = vmatpush2.msra.mxu0 0.0
    %1255 = vmatprep.subr.mxu0 0.0
    %1256 = vmatpush2.msra.mxu0 0.0
    %1257 = vmatprep.subr.mxu0 0.0
    %1258 = vmatpush2.msra.mxu0 0.0
    %1259 = vmatprep.subr.mxu0 0.0
    %1260 = vmatpush2.msra.mxu0 0.0
    %1261 = vmatprep.subr.mxu0 0.0
    %1262 = vmatpush2.msra.mxu0 0.0
    %1263 = vmatprep.subr.mxu0 0.0
    %1264 = vmatpush2.msra.mxu0 0.0
    %1265 = vmatprep.mubr.f32.mxu0 0.0
    %1266 = vmatmul.mubr.f32.gmra.mxu0 %v1178
    %v1267 = vpop.f32.mrf.mxu0
    %v1268 = vadd.f32 %v1176, %v1267
    %v1269 = vpop.f32.mrf.mxu0
    %1270 = vmatprep.mubr.f32.mxu0 0.0
    %1271 = vmatmul.mubr.f32.gmra.mxu0 %v1181
    %v1272 = vpop.f32.mrf.mxu0
    %v1273 = vadd.f32 %v1176, %v1272
    %v1274 = vpop.f32.mrf.mxu0
    %1275 = vmatprep.mubr.f32.mxu0 0.0
    %1276 = vmatmul.mubr.f32.gmra.mxu0 %v1184
    %v1277 = vpop.f32.mrf.mxu0
    %v1278 = vadd.f32 %v1176, %v1277
    %v1279 = vpop.f32.mrf.mxu0
    %1280 = vmatprep.mubr.f32.mxu0 0.0
    %1281 = vmatmul.mubr.f32.gmra.mxu0 %v1187
    %v1282 = vpop.f32.mrf.mxu0
    %v1283 = vadd.f32 %v1176, %v1282
    %v1284 = vpop.f32.mrf.mxu0
    %1285 = vmatprep.mubr.f32.mxu0 0.0
    %1286 = vmatmul.mubr.f32.gmra.mxu0 %v1190
    %v1287 = vpop.f32.mrf.mxu0
    %v1288 = vadd.f32 %v1176, %v1287
    %v1289 = vpop.f32.mrf.mxu0
    %1290 = vmatprep.mubr.f32.mxu0 0.0
    %1291 = vmatmul.mubr.f32.gmra.mxu0 %v1193
    %v1292 = vpop.f32.mrf.mxu0
    %v1293 = vadd.f32 %v1176, %v1292
    %v1294 = vpop.f32.mrf.mxu0
    %1295 = vmatprep.mubr.f32.mxu0 0.0
    %1296 = vmatmul.mubr.f32.gmra.mxu0 %v1196
    %v1297 = vpop.f32.mrf.mxu0
    %v1298 = vadd.f32 %v1176, %v1297
    %v1299 = vpop.f32.mrf.mxu0
    %1300 = vmatprep.mubr.f32.mxu0 0.0
    %1301 = vmatmul.mubr.f32.gmra.mxu0 %v1199
    %v1302 = vpop.f32.mrf.mxu0
    %v1303 = vadd.f32 %v1176, %v1302
    %v1304 = vpop.f32.mrf.mxu0
    %1305 = vdwg.mxu0
    %v1306 = vmul.f32 %v1268, %v1268
    %v1307 = vmul.f32 %v1273, %v1273
    %v1308 = vmul.f32 %v1278, %v1278
    %v1309 = vmul.f32 %v1283, %v1283
    %v1310 = vmul.f32 %v1288, %v1288
    %v1311 = vmul.f32 %v1293, %v1293
    %v1312 = vmul.f32 %v1298, %v1298
    %v1313 = vmul.f32 %v1303, %v1303
    %v1314 = vsel %vm206, %v1306, 0.0
    %1315 = vadd.xlane.f32.xlu0 %v1314
    %v1316 = vpop.xlane.xlu0 %1315
    %v1317 = vsel %vm206, %v1307, 0.0
    %1318 = vadd.xlane.f32.xlu0 %v1317
    %v1319 = vpop.xlane.xlu0 %1318
    %v1320 = vsel %vm206, %v1308, 0.0
    %1321 = vadd.xlane.f32.xlu0 %v1320
    %v1322 = vpop.xlane.xlu0 %1321
    %v1323 = vsel %vm206, %v1309, 0.0
    %1324 = vadd.xlane.f32.xlu0 %v1323
    %v1325 = vpop.xlane.xlu0 %1324
    %v1326 = vsel %vm206, %v1310, 0.0
    %1327 = vadd.xlane.f32.xlu0 %v1326
    %v1328 = vpop.xlane.xlu0 %1327
    %v1329 = vsel %vm206, %v1311, 0.0
    %1330 = vadd.xlane.f32.xlu0 %v1329
    %v1331 = vpop.xlane.xlu0 %1330
    %v1332 = vsel %vm206, %v1312, 0.0
    %1333 = vadd.xlane.f32.xlu0 %v1332
    %v1334 = vpop.xlane.xlu0 %1333
    %v1335 = vsel %vm206, %v1313, 0.0
    %1336 = vadd.xlane.f32.xlu0 %v1335
    %v1337 = vpop.xlane.xlu0 %1336
    %v1338 = vmax.f32 %v1316, 1e-24
    %v1339 = vmax.f32 %v1319, 1e-24
    %v1340 = vmax.f32 %v1322, 1e-24
    %v1341 = vmax.f32 %v1325, 1e-24
    %v1342 = vmax.f32 %v1328, 1e-24
    %v1343 = vmax.f32 %v1331, 1e-24
    %v1344 = vmax.f32 %v1334, 1e-24
    %v1345 = vmax.f32 %v1337, 1e-24
    %v1346 = vrsqrt.pop %v1338
    %v1347 = vrsqrt.pop %v1339
    %v1348 = vrsqrt.pop %v1340
    %v1349 = vrsqrt.pop %v1341
    %v1350 = vrsqrt.pop %v1342
    %v1351 = vrsqrt.pop %v1343
    %v1352 = vrsqrt.pop %v1344
    %v1353 = vrsqrt.pop %v1345
    %v1354 = vmul.f32 %v1268, %v1346
    %v1355 = vmul.f32 %v1273, %v1347
    %v1356 = vmul.f32 %v1278, %v1348
    %v1357 = vmul.f32 %v1283, %v1349
    %v1358 = vmul.f32 %v1288, %v1350
    %v1359 = vmul.f32 %v1293, %v1351
    %v1360 = vmul.f32 %v1298, %v1352
    %v1361 = vmul.f32 %v1303, %v1353
    %v1362 = vmax.f32 %v1354, 0.0
    %v1363 = vmax.f32 %v1355, 0.0
    %v1364 = vmax.f32 %v1356, 0.0
    %v1365 = vmax.f32 %v1357, 0.0
    %v1366 = vmax.f32 %v1358, 0.0
    %v1367 = vmax.f32 %v1359, 0.0
    %v1368 = vmax.f32 %v1360, 0.0
    %v1369 = vmax.f32 %v1361, 0.0
    %v1371 = vsel %vm206, %v1362, 0
    %v1374 = vsel %vm206, %v1363, 0
    %v1377 = vsel %vm206, %v1364, 0
    %v1380 = vsel %vm206, %v1365, 0
    %v1383 = vsel %vm206, %v1366, 0
    %v1386 = vsel %vm206, %v1367, 0
    %v1389 = vsel %vm206, %v1368, 0
    %v1392 = vsel %vm206, %v1369, 0
    %1394 = vmatprep.subr.mxu0 0.0
    %1395 = vmatpush1.msra.mxu0 0.0
    %1396 = vmatprep.subr.mxu0 0.0
    %1397 = vmatpush1.msra.mxu0 0.0
    %1398 = vmatprep.subr.mxu0 0.0
    %1399 = vmatpush1.msra.mxu0 0.0
    %1400 = vmatprep.subr.mxu0 0.0
    %1401 = vmatpush1.msra.mxu0 0.0
    %1402 = vmatprep.subr.mxu0 0.0
    %1403 = vmatpush1.msra.mxu0 0.0
    %1404 = vmatprep.subr.mxu0 0.0
    %1405 = vmatpush1.msra.mxu0 0.0
    %1406 = vmatprep.subr.mxu0 0.0
    %1407 = vmatpush1.msra.mxu0 0.0
    %1408 = vmatprep.subr.mxu0 0.0
    %1409 = vmatpush1.msra.mxu0 0.0
    %1410 = vmatprep.subr.mxu0 0.0
    %1411 = vmatpush1.msra.mxu0 0.0
    %1412 = vmatprep.subr.mxu0 0.0
    %1413 = vmatpush1.msra.mxu0 0.0
    %1414 = vmatprep.subr.mxu0 0.0
    %1415 = vmatpush1.msra.mxu0 0.0
    %1416 = vmatprep.subr.mxu0 0.0
    %1417 = vmatpush1.msra.mxu0 0.0
    %1418 = vmatprep.subr.mxu0 0.0
    %1419 = vmatpush1.msra.mxu0 %v62
    %1420 = vmatprep.subr.mxu0 0.0
    %1421 = vmatpush1.msra.mxu0 %v61
    %1422 = vmatprep.subr.mxu0 0.0
    %1423 = vmatpush1.msra.mxu0 %v60
    %1424 = vmatprep.subr.mxu0 0.0
    %1425 = vmatpush1.msra.mxu0 %v59
    %1426 = vmatprep.subr.mxu0 0.0
    %1427 = vmatpush2.msra.mxu0 0.0
    %1428 = vmatprep.subr.mxu0 0.0
    %1429 = vmatpush2.msra.mxu0 0.0
    %1430 = vmatprep.subr.mxu0 0.0
    %1431 = vmatpush2.msra.mxu0 0.0
    %1432 = vmatprep.subr.mxu0 0.0
    %1433 = vmatpush2.msra.mxu0 0.0
    %1434 = vmatprep.subr.mxu0 0.0
    %1435 = vmatpush2.msra.mxu0 0.0
    %1436 = vmatprep.subr.mxu0 0.0
    %1437 = vmatpush2.msra.mxu0 0.0
    %1438 = vmatprep.subr.mxu0 0.0
    %1439 = vmatpush2.msra.mxu0 0.0
    %1440 = vmatprep.subr.mxu0 0.0
    %1441 = vmatpush2.msra.mxu0 0.0
    %1442 = vmatprep.subr.mxu0 0.0
    %1443 = vmatpush2.msra.mxu0 0.0
    %1444 = vmatprep.subr.mxu0 0.0
    %1445 = vmatpush2.msra.mxu0 0.0
    %1446 = vmatprep.subr.mxu0 0.0
    %1447 = vmatpush2.msra.mxu0 0.0
    %1448 = vmatprep.subr.mxu0 0.0
    %1449 = vmatpush2.msra.mxu0 0.0
    %1450 = vmatprep.subr.mxu0 0.0
    %1451 = vmatpush2.msra.mxu0 0.0
    %1452 = vmatprep.subr.mxu0 0.0
    %1453 = vmatpush2.msra.mxu0 0.0
    %1454 = vmatprep.subr.mxu0 0.0
    %1455 = vmatpush2.msra.mxu0 0.0
    %1456 = vmatprep.subr.mxu0 0.0
    %1457 = vmatpush2.msra.mxu0 0.0
    %1458 = vmatprep.mubr.f32.mxu0 0.0
    %1459 = vmatmul.mubr.f32.gmra.mxu0 %v1371
    %v1460 = vpop.f32.mrf.mxu0
    %v1461 = vadd.f32 0.0, %v1460
    %v1462 = vpop.f32.mrf.mxu0
    %1463 = vmatprep.mubr.f32.mxu0 0.0
    %1464 = vmatmul.mubr.f32.gmra.mxu0 %v1374
    %v1465 = vpop.f32.mrf.mxu0
    %v1466 = vadd.f32 0.0, %v1465
    %v1467 = vpop.f32.mrf.mxu0
    %1468 = vmatprep.mubr.f32.mxu0 0.0
    %1469 = vmatmul.mubr.f32.gmra.mxu0 %v1377
    %v1470 = vpop.f32.mrf.mxu0
    %v1471 = vadd.f32 0.0, %v1470
    %v1472 = vpop.f32.mrf.mxu0
    %1473 = vmatprep.mubr.f32.mxu0 0.0
    %1474 = vmatmul.mubr.f32.gmra.mxu0 %v1380
    %v1475 = vpop.f32.mrf.mxu0
    %v1476 = vadd.f32 0.0, %v1475
    %v1477 = vpop.f32.mrf.mxu0
    %1478 = vmatprep.mubr.f32.mxu0 0.0
    %1479 = vmatmul.mubr.f32.gmra.mxu0 %v1383
    %v1480 = vpop.f32.mrf.mxu0
    %v1481 = vadd.f32 0.0, %v1480
    %v1482 = vpop.f32.mrf.mxu0
    %1483 = vmatprep.mubr.f32.mxu0 0.0
    %1484 = vmatmul.mubr.f32.gmra.mxu0 %v1386
    %v1485 = vpop.f32.mrf.mxu0
    %v1486 = vadd.f32 0.0, %v1485
    %v1487 = vpop.f32.mrf.mxu0
    %1488 = vmatprep.mubr.f32.mxu0 0.0
    %1489 = vmatmul.mubr.f32.gmra.mxu0 %v1389
    %v1490 = vpop.f32.mrf.mxu0
    %v1491 = vadd.f32 0.0, %v1490
    %v1492 = vpop.f32.mrf.mxu0
    %1493 = vmatprep.mubr.f32.mxu0 0.0
    %1494 = vmatmul.mubr.f32.gmra.mxu0 %v1392
    %v1495 = vpop.f32.mrf.mxu0
    %v1496 = vadd.f32 0.0, %v1495
    %v1497 = vpop.f32.mrf.mxu0
    %1498 = vdwg.mxu0
    %v1499 = vadd.f32 %v765, %v1461
    %v1500 = vadd.f32 %v770, %v1466
    %v1501 = vadd.f32 %v775, %v1471
    %v1502 = vadd.f32 %v780, %v1476
    %v1503 = vadd.f32 %v785, %v1481
    %v1504 = vadd.f32 %v790, %v1486
    %v1505 = vadd.f32 %v795, %v1491
    %v1506 = vadd.f32 %v800, %v1496
    %1507 = vmatprep.subr.mxu0 0.0
    %1508 = vmatpush1.msra.mxu0 0.0
    %1509 = vmatprep.subr.mxu0 0.0
    %1510 = vmatpush1.msra.mxu0 0.0
    %1511 = vmatprep.subr.mxu0 0.0
    %1512 = vmatpush1.msra.mxu0 0.0
    %1513 = vmatprep.subr.mxu0 0.0
    %1514 = vmatpush1.msra.mxu0 0.0
    %1515 = vmatprep.subr.mxu0 0.0
    %1516 = vmatpush1.msra.mxu0 0.0
    %1517 = vmatprep.subr.mxu0 0.0
    %1518 = vmatpush1.msra.mxu0 0.0
    %1519 = vmatprep.subr.mxu0 0.0
    %1520 = vmatpush1.msra.mxu0 0.0
    %1521 = vmatprep.subr.mxu0 0.0
    %1522 = vmatpush1.msra.mxu0 0.0
    %1523 = vmatprep.subr.mxu0 0.0
    %1524 = vmatpush1.msra.mxu0 0.0
    %1525 = vmatprep.subr.mxu0 0.0
    %1526 = vmatpush1.msra.mxu0 0.0
    %1527 = vmatprep.subr.mxu0 0.0
    %1528 = vmatpush1.msra.mxu0 0.0
    %1529 = vmatprep.subr.mxu0 0.0
    %1530 = vmatpush1.msra.mxu0 0.0
    %1531 = vmatprep.subr.mxu0 0.0
    %1532 = vmatpush1.msra.mxu0 %v45
    %1533 = vmatprep.subr.mxu0 0.0
    %1534 = vmatpush1.msra.mxu0 %v44
    %1535 = vmatprep.subr.mxu0 0.0
    %1536 = vmatpush1.msra.mxu0 %v43
    %1537 = vmatprep.subr.mxu0 0.0
    %1538 = vmatpush1.msra.mxu0 %v42
    %1539 = vmatprep.subr.mxu0 0.0
    %1540 = vmatpush2.msra.mxu0 0.0
    %1541 = vmatprep.subr.mxu0 0.0
    %1542 = vmatpush2.msra.mxu0 0.0
    %1543 = vmatprep.subr.mxu0 0.0
    %1544 = vmatpush2.msra.mxu0 0.0
    %1545 = vmatprep.subr.mxu0 0.0
    %1546 = vmatpush2.msra.mxu0 0.0
    %1547 = vmatprep.subr.mxu0 0.0
    %1548 = vmatpush2.msra.mxu0 0.0
    %1549 = vmatprep.subr.mxu0 0.0
    %1550 = vmatpush2.msra.mxu0 0.0
    %1551 = vmatprep.subr.mxu0 0.0
    %1552 = vmatpush2.msra.mxu0 0.0
    %1553 = vmatprep.subr.mxu0 0.0
    %1554 = vmatpush2.msra.mxu0 0.0
    %1555 = vmatprep.subr.mxu0 0.0
    %1556 = vmatpush2.msra.mxu0 0.0
    %1557 = vmatprep.subr.mxu0 0.0
    %1558 = vmatpush2.msra.mxu0 0.0
    %1559 = vmatprep.subr.mxu0 0.0
    %1560 = vmatpush2.msra.mxu0 0.0
    %1561 = vmatprep.subr.mxu0 0.0
    %1562 = vmatpush2.msra.mxu0 0.0
    %1563 = vmatprep.subr.mxu0 0.0
    %1564 = vmatpush2.msra.mxu0 0.0
    %1565 = vmatprep.subr.mxu0 0.0
    %1566 = vmatpush2.msra.mxu0 0.0
    %1567 = vmatprep.subr.mxu0 0.0
    %1568 = vmatpush2.msra.mxu0 0.0
    %1569 = vmatprep.subr.mxu0 0.0
    %1570 = vmatpush2.msra.mxu0 0.0
    %1571 = vmatprep.mubr.f32.mxu0 0.0
    %1572 = vmatmul.mubr.f32.gmra.mxu0 %v1371
    %v1573 = vpop.f32.mrf.mxu0
    %v1574 = vadd.f32 0.0, %v1573
    %v1575 = vpop.f32.mrf.mxu0
    %1576 = vmatprep.mubr.f32.mxu0 0.0
    %1577 = vmatmul.mubr.f32.gmra.mxu0 %v1374
    %v1578 = vpop.f32.mrf.mxu0
    %v1579 = vadd.f32 0.0, %v1578
    %v1580 = vpop.f32.mrf.mxu0
    %1581 = vmatprep.mubr.f32.mxu0 0.0
    %1582 = vmatmul.mubr.f32.gmra.mxu0 %v1377
    %v1583 = vpop.f32.mrf.mxu0
    %v1584 = vadd.f32 0.0, %v1583
    %v1585 = vpop.f32.mrf.mxu0
    %1586 = vmatprep.mubr.f32.mxu0 0.0
    %1587 = vmatmul.mubr.f32.gmra.mxu0 %v1380
    %v1588 = vpop.f32.mrf.mxu0
    %v1589 = vadd.f32 0.0, %v1588
    %v1590 = vpop.f32.mrf.mxu0
    %1591 = vmatprep.mubr.f32.mxu0 0.0
    %1592 = vmatmul.mubr.f32.gmra.mxu0 %v1383
    %v1593 = vpop.f32.mrf.mxu0
    %v1594 = vadd.f32 0.0, %v1593
    %v1595 = vpop.f32.mrf.mxu0
    %1596 = vmatprep.mubr.f32.mxu0 0.0
    %1597 = vmatmul.mubr.f32.gmra.mxu0 %v1386
    %v1598 = vpop.f32.mrf.mxu0
    %v1599 = vadd.f32 0.0, %v1598
    %v1600 = vpop.f32.mrf.mxu0
    %1601 = vmatprep.mubr.f32.mxu0 0.0
    %1602 = vmatmul.mubr.f32.gmra.mxu0 %v1389
    %v1603 = vpop.f32.mrf.mxu0
    %v1604 = vadd.f32 0.0, %v1603
    %v1605 = vpop.f32.mrf.mxu0
    %1606 = vmatprep.mubr.f32.mxu0 0.0
    %1607 = vmatmul.mubr.f32.gmra.mxu0 %v1392
    %v1608 = vpop.f32.mrf.mxu0
    %v1609 = vadd.f32 0.0, %v1608
    %v1610 = vpop.f32.mrf.mxu0
    %1611 = vdwg.mxu0
    %v1613 = vsel %vm206, %v52, 0
    %v1616 = vsel %vm206, %v1574, 0
    %v1619 = vsel %vm206, %v1579, 0
    %v1622 = vsel %vm206, %v1584, 0
    %v1625 = vsel %vm206, %v1589, 0
    %v1628 = vsel %vm206, %v1594, 0
    %v1631 = vsel %vm206, %v1599, 0
    %v1634 = vsel %vm206, %v1604, 0
    %v1637 = vsel %vm206, %v1609, 0
    %1639 = vmatprep.subr.mxu0 0.0
    %1640 = vmatpush1.xpose.msra.mxu0 0.0
    %1641 = vmatprep.subr.mxu0 0.0
    %1642 = vmatpush1.xpose.msra.mxu0 0.0
    %1643 = vmatprep.subr.mxu0 0.0
    %1644 = vmatpush1.xpose.msra.mxu0 0.0
    %1645 = vmatprep.subr.mxu0 0.0
    %1646 = vmatpush1.xpose.msra.mxu0 0.0
    %1647 = vmatprep.subr.mxu0 0.0
    %1648 = vmatpush1.xpose.msra.mxu0 0.0
    %1649 = vmatprep.subr.mxu0 0.0
    %1650 = vmatpush1.xpose.msra.mxu0 0.0
    %1651 = vmatprep.subr.mxu0 0.0
    %1652 = vmatpush1.xpose.msra.mxu0 0.0
    %1653 = vmatprep.subr.mxu0 0.0
    %1654 = vmatpush1.xpose.msra.mxu0 0.0
    %1655 = vmatprep.subr.mxu0 0.0
    %1656 = vmatpush1.xpose.msra.mxu0 %v1637
    %1657 = vmatprep.subr.mxu0 0.0
    %1658 = vmatpush1.xpose.msra.mxu0 %v1634
    %1659 = vmatprep.subr.mxu0 0.0
    %1660 = vmatpush1.xpose.msra.mxu0 %v1631
    %1661 = vmatprep.subr.mxu0 0.0
    %1662 = vmatpush1.xpose.msra.mxu0 %v1628
    %1663 = vmatprep.subr.mxu0 0.0
    %1664 = vmatpush1.xpose.msra.mxu0 %v1625
    %1665 = vmatprep.subr.mxu0 0.0
    %1666 = vmatpush1.xpose.msra.mxu0 %v1622
    %1667 = vmatprep.subr.mxu0 0.0
    %1668 = vmatpush1.xpose.msra.mxu0 %v1619
    %1669 = vmatprep.subr.mxu0 0.0
    %1670 = vmatpush1.xpose.msra.mxu0 %v1616
    %1671 = vmatprep.subr.mxu0 0.0
    %1672 = vmatpush2.xpose.msra.mxu0 0.0
    %1673 = vmatprep.subr.mxu0 0.0
    %1674 = vmatpush2.xpose.msra.mxu0 0.0
    %1675 = vmatprep.subr.mxu0 0.0
    %1676 = vmatpush2.xpose.msra.mxu0 0.0
    %1677 = vmatprep.subr.mxu0 0.0
    %1678 = vmatpush2.xpose.msra.mxu0 0.0
    %1679 = vmatprep.subr.mxu0 0.0
    %1680 = vmatpush2.xpose.msra.mxu0 0.0
    %1681 = vmatprep.subr.mxu0 0.0
    %1682 = vmatpush2.xpose.msra.mxu0 0.0
    %1683 = vmatprep.subr.mxu0 0.0
    %1684 = vmatpush2.xpose.msra.mxu0 0.0
    %1685 = vmatprep.subr.mxu0 0.0
    %1686 = vmatpush2.xpose.msra.mxu0 0.0
    %1687 = vmatprep.subr.mxu0 0.0
    %1688 = vmatpush2.xpose.msra.mxu0 0.0
    %1689 = vmatprep.subr.mxu0 0.0
    %1690 = vmatpush2.xpose.msra.mxu0 0.0
    %1691 = vmatprep.subr.mxu0 0.0
    %1692 = vmatpush2.xpose.msra.mxu0 0.0
    %1693 = vmatprep.subr.mxu0 0.0
    %1694 = vmatpush2.xpose.msra.mxu0 0.0
    %1695 = vmatprep.subr.mxu0 0.0
    %1696 = vmatpush2.xpose.msra.mxu0 0.0
    %1697 = vmatprep.subr.mxu0 0.0
    %1698 = vmatpush2.xpose.msra.mxu0 0.0
    %1699 = vmatprep.subr.mxu0 0.0
    %1700 = vmatpush2.xpose.msra.mxu0 0.0
    %1701 = vmatprep.subr.mxu0 0.0
    %1702 = vmatpush2.xpose.msra.mxu0 0.0
    %1703 = vmatprep.mubr.f32.mxu0 0.0
    %1704 = vmatmul.mubr.f32.gmra.mxu0 %v1613
    %v1705 = vpop.f32.mrf.mxu0
    %v1706 = vadd.f32 0.0, %v1705
    %v1707 = vpop.f32.mrf.mxu0
    %1708 = vdwg.mxu0
    %v1709 = vlaneseq
    %v1710 = vshrl.u32 %v1709, 7
    %v1711 = vsub.s32 0, %v1710
    %v1712 = vrot.slane %v53, %v1711
    %v1713 = vmul.f32 %v1574, %v1712
    %v1714 = vmul.f32 %v1579, %v1712
    %v1715 = vmul.f32 %v1584, %v1712
    %v1716 = vmul.f32 %v1589, %v1712
    %v1717 = vmul.f32 %v1594, %v1712
    %v1718 = vmul.f32 %v1599, %v1712
    %v1719 = vmul.f32 %v1604, %v1712
    %v1720 = vmul.f32 %v1609, %v1712
    %v1721 = vsel %vm206, %v1713, 0.0
    %1722 = vadd.xlane.f32.xlu0 %v1721
    %v1723 = vpop.xlane.xlu0 %1722
    %v1724 = vsel %vm206, %v1714, 0.0
    %1725 = vadd.xlane.f32.xlu0 %v1724
    %v1726 = vpop.xlane.xlu0 %1725
    %v1727 = vsel %vm206, %v1715, 0.0
    %1728 = vadd.xlane.f32.xlu0 %v1727
    %v1729 = vpop.xlane.xlu0 %1728
    %v1730 = vsel %vm206, %v1716, 0.0
    %1731 = vadd.xlane.f32.xlu0 %v1730
    %v1732 = vpop.xlane.xlu0 %1731
    %v1733 = vsel %vm206, %v1717, 0.0
    %1734 = vadd.xlane.f32.xlu0 %v1733
    %v1735 = vpop.xlane.xlu0 %1734
    %v1736 = vsel %vm206, %v1718, 0.0
    %1737 = vadd.xlane.f32.xlu0 %v1736
    %v1738 = vpop.xlane.xlu0 %1737
    %v1739 = vsel %vm206, %v1719, 0.0
    %1740 = vadd.xlane.f32.xlu0 %v1739
    %v1741 = vpop.xlane.xlu0 %1740
    %v1742 = vsel %vm206, %v1720, 0.0
    %1743 = vadd.xlane.f32.xlu0 %v1742
    %v1744 = vpop.xlane.xlu0 %1743
    %v1745 = vlaneseq
    %v1746 = vshrl.u32 %v1745, 7
    %v1747 = vsub.s32 0, %v1746
    %v1748 = vrot.slane %v1706, %v1747
    %v1749 = vadd.f32 %v1723, %v1748
    %v1750 = vadd.f32 %v1726, %v1748
    %v1751 = vadd.f32 %v1729, %v1748
    %v1752 = vadd.f32 %v1732, %v1748
    %v1753 = vadd.f32 %v1735, %v1748
    %v1754 = vadd.f32 %v1738, %v1748
    %v1755 = vadd.f32 %v1741, %v1748
    %v1756 = vadd.f32 %v1744, %v1748
    %vm1757 = vcmp.gt.f32.partialorder %v1749, 0.0
    %vm1758 = vcmp.gt.f32.partialorder %v1750, 0.0
    %vm1759 = vcmp.gt.f32.partialorder %v1751, 0.0
    %vm1760 = vcmp.gt.f32.partialorder %v1752, 0.0
    %vm1761 = vcmp.gt.f32.partialorder %v1753, 0.0
    %vm1762 = vcmp.gt.f32.partialorder %v1754, 0.0
    %vm1763 = vcmp.gt.f32.partialorder %v1755, 0.0
    %vm1764 = vcmp.gt.f32.partialorder %v1756, 0.0
    %v1765 = vmul.f32 %v1749, 0.2
    %v1766 = vmul.f32 %v1750, 0.2
    %v1767 = vmul.f32 %v1751, 0.2
    %v1768 = vmul.f32 %v1752, 0.2
    %v1769 = vmul.f32 %v1753, 0.2
    %v1770 = vmul.f32 %v1754, 0.2
    %v1771 = vmul.f32 %v1755, 0.2
    %v1772 = vmul.f32 %v1756, 0.2
    %v1773 = vsel %vm1757, %v1749, %v1765
    %v1774 = vsel %vm1758, %v1750, %v1766
    %v1775 = vsel %vm1759, %v1751, %v1767
    %v1776 = vsel %vm1760, %v1752, %v1768
    %v1777 = vsel %vm1761, %v1753, %v1769
    %v1778 = vsel %vm1762, %v1754, %v1770
    %v1779 = vsel %vm1763, %v1755, %v1771
    %v1780 = vsel %vm1764, %v1756, %v1772
    %v1781 = vadd.f32 %v1773, %v28
    %v1782 = vadd.f32 %v1774, %v29
    %v1783 = vadd.f32 %v1775, %v30
    %v1784 = vadd.f32 %v1776, %v31
    %v1785 = vadd.f32 %v1777, %v32
    %v1786 = vadd.f32 %v1778, %v33
    %v1787 = vadd.f32 %v1779, %v34
    %v1788 = vadd.f32 %v1780, %v35
    %v1789 = vsel %vm384, %v1781, -inf
    %1790 = vmax.xlane.f32.xlu0 %v1789
    %v1791 = vpop.xlane.xlu0 %1790
    %v1792 = vsel %vm384, %v1782, -inf
    %1793 = vmax.xlane.f32.xlu0 %v1792
    %v1794 = vpop.xlane.xlu0 %1793
    %v1795 = vsel %vm384, %v1783, -inf
    %1796 = vmax.xlane.f32.xlu0 %v1795
    %v1797 = vpop.xlane.xlu0 %1796
    %v1798 = vsel %vm384, %v1784, -inf
    %1799 = vmax.xlane.f32.xlu0 %v1798
    %v1800 = vpop.xlane.xlu0 %1799
    %v1801 = vsel %vm384, %v1785, -inf
    %1802 = vmax.xlane.f32.xlu0 %v1801
    %v1803 = vpop.xlane.xlu0 %1802
    %v1804 = vsel %vm384, %v1786, -inf
    %1805 = vmax.xlane.f32.xlu0 %v1804
    %v1806 = vpop.xlane.xlu0 %1805
    %v1807 = vsel %vm384, %v1787, -inf
    %1808 = vmax.xlane.f32.xlu0 %v1807
    %v1809 = vpop.xlane.xlu0 %1808
    %v1810 = vsel %vm384, %v1788, -inf
    %1811 = vmax.xlane.f32.xlu0 %v1810
    %v1812 = vpop.xlane.xlu0 %1811
    %v1813 = vsub.f32 %v1781, %v1791
    %v1814 = vsub.f32 %v1782, %v1794
    %v1815 = vsub.f32 %v1783, %v1797
    %v1816 = vsub.f32 %v1784, %v1800
    %v1817 = vsub.f32 %v1785, %v1803
    %v1818 = vsub.f32 %v1786, %v1806
    %v1819 = vsub.f32 %v1787, %v1809
    %v1820 = vsub.f32 %v1788, %v1812
    %v1821 = vmul.f32 %v1813, 1.442695
    %v1822 = vpow.pop %v1821
    %v1823 = vmul.f32 %v1814, 1.442695
    %v1824 = vpow.pop %v1823
    %v1825 = vmul.f32 %v1815, 1.442695
    %v1826 = vpow.pop %v1825
    %v1827 = vmul.f32 %v1816, 1.442695
    %v1828 = vpow.pop %v1827
    %v1829 = vmul.f32 %v1817, 1.442695
    %v1830 = vpow.pop %v1829
    %v1831 = vmul.f32 %v1818, 1.442695
    %v1832 = vpow.pop %v1831
    %v1833 = vmul.f32 %v1819, 1.442695
    %v1834 = vpow.pop %v1833
    %v1835 = vmul.f32 %v1820, 1.442695
    %v1836 = vpow.pop %v1835
    %v1837 = vsel %vm384, %v1822, 0.0
    %1838 = vadd.xlane.f32.xlu0 %v1837
    %v1839 = vpop.xlane.xlu0 %1838
    %v1840 = vsel %vm384, %v1824, 0.0
    %1841 = vadd.xlane.f32.xlu0 %v1840
    %v1842 = vpop.xlane.xlu0 %1841
    %v1843 = vsel %vm384, %v1826, 0.0
    %1844 = vadd.xlane.f32.xlu0 %v1843
    %v1845 = vpop.xlane.xlu0 %1844
    %v1846 = vsel %vm384, %v1828, 0.0
    %1847 = vadd.xlane.f32.xlu0 %v1846
    %v1848 = vpop.xlane.xlu0 %1847
    %v1849 = vsel %vm384, %v1830, 0.0
    %1850 = vadd.xlane.f32.xlu0 %v1849
    %v1851 = vpop.xlane.xlu0 %1850
    %v1852 = vsel %vm384, %v1832, 0.0
    %1853 = vadd.xlane.f32.xlu0 %v1852
    %v1854 = vpop.xlane.xlu0 %1853
    %v1855 = vsel %vm384, %v1834, 0.0
    %1856 = vadd.xlane.f32.xlu0 %v1855
    %v1857 = vpop.xlane.xlu0 %1856
    %v1858 = vsel %vm384, %v1836, 0.0
    %1859 = vadd.xlane.f32.xlu0 %v1858
    %v1860 = vpop.xlane.xlu0 %1859
    %v1861 = vrcp.pop %v1839
    %v1862 = vrcp.pop %v1842
    %v1863 = vrcp.pop %v1845
    %v1864 = vrcp.pop %v1848
    %v1865 = vrcp.pop %v1851
    %v1866 = vrcp.pop %v1854
    %v1867 = vrcp.pop %v1857
    %v1868 = vrcp.pop %v1860
    %v1869 = vmul.f32 %v1822, %v1861
    %v1870 = vmul.f32 %v1824, %v1862
    %v1871 = vmul.f32 %v1826, %v1863
    %v1872 = vmul.f32 %v1828, %v1864
    %v1873 = vmul.f32 %v1830, %v1865
    %v1874 = vmul.f32 %v1832, %v1866
    %v1875 = vmul.f32 %v1834, %v1867
    %v1876 = vmul.f32 %v1836, %v1868
    %v1877 = vlaneseq
    %v1878 = vshrl.u32 %v1877, 7
    %v1879 = vsub.s32 0, %v1878
    %v1880 = vrot.slane %v54, %v1879
    %v1882 = vsel %vm384, %v1869, 0
    %v1885 = vsel %vm384, %v1870, 0
    %v1888 = vsel %vm384, %v1871, 0
    %v1891 = vsel %vm384, %v1872, 0
    %v1894 = vsel %vm384, %v1873, 0
    %v1897 = vsel %vm384, %v1874, 0
    %v1900 = vsel %vm384, %v1875, 0
    %v1903 = vsel %vm384, %v1876, 0
    %1905 = vmatprep.subr.mxu0 0.0
    %1906 = vmatpush1.msra.mxu0 0.0
    %1907 = vmatprep.subr.mxu0 0.0
    %1908 = vmatpush1.msra.mxu0 0.0
    %1909 = vmatprep.subr.mxu0 0.0
    %1910 = vmatpush1.msra.mxu0 0.0
    %1911 = vmatprep.subr.mxu0 0.0
    %1912 = vmatpush1.msra.mxu0 0.0
    %1913 = vmatprep.subr.mxu0 0.0
    %1914 = vmatpush1.msra.mxu0 0.0
    %1915 = vmatprep.subr.mxu0 0.0
    %1916 = vmatpush1.msra.mxu0 0.0
    %1917 = vmatprep.subr.mxu0 0.0
    %1918 = vmatpush1.msra.mxu0 0.0
    %1919 = vmatprep.subr.mxu0 0.0
    %1920 = vmatpush1.msra.mxu0 0.0
    %1921 = vmatprep.subr.mxu0 0.0
    %1922 = vmatpush1.msra.mxu0 %v1609
    %1923 = vmatprep.subr.mxu0 0.0
    %1924 = vmatpush1.msra.mxu0 %v1604
    %1925 = vmatprep.subr.mxu0 0.0
    %1926 = vmatpush1.msra.mxu0 %v1599
    %1927 = vmatprep.subr.mxu0 0.0
    %1928 = vmatpush1.msra.mxu0 %v1594
    %1929 = vmatprep.subr.mxu0 0.0
    %1930 = vmatpush1.msra.mxu0 %v1589
    %1931 = vmatprep.subr.mxu0 0.0
    %1932 = vmatpush1.msra.mxu0 %v1584
    %1933 = vmatprep.subr.mxu0 0.0
    %1934 = vmatpush1.msra.mxu0 %v1579
    %1935 = vmatprep.subr.mxu0 0.0
    %1936 = vmatpush1.msra.mxu0 %v1574
    %1937 = vmatprep.subr.mxu0 0.0
    %1938 = vmatpush2.msra.mxu0 0.0
    %1939 = vmatprep.subr.mxu0 0.0
    %1940 = vmatpush2.msra.mxu0 0.0
    %1941 = vmatprep.subr.mxu0 0.0
    %1942 = vmatpush2.msra.mxu0 0.0
    %1943 = vmatprep.subr.mxu0 0.0
    %1944 = vmatpush2.msra.mxu0 0.0
    %1945 = vmatprep.subr.mxu0 0.0
    %1946 = vmatpush2.msra.mxu0 0.0
    %1947 = vmatprep.subr.mxu0 0.0
    %1948 = vmatpush2.msra.mxu0 0.0
    %1949 = vmatprep.subr.mxu0 0.0
    %1950 = vmatpush2.msra.mxu0 0.0
    %1951 = vmatprep.subr.mxu0 0.0
    %1952 = vmatpush2.msra.mxu0 0.0
    %1953 = vmatprep.subr.mxu0 0.0
    %1954 = vmatpush2.msra.mxu0 0.0
    %1955 = vmatprep.subr.mxu0 0.0
    %1956 = vmatpush2.msra.mxu0 0.0
    %1957 = vmatprep.subr.mxu0 0.0
    %1958 = vmatpush2.msra.mxu0 0.0
    %1959 = vmatprep.subr.mxu0 0.0
    %1960 = vmatpush2.msra.mxu0 0.0
    %1961 = vmatprep.subr.mxu0 0.0
    %1962 = vmatpush2.msra.mxu0 0.0
    %1963 = vmatprep.subr.mxu0 0.0
    %1964 = vmatpush2.msra.mxu0 0.0
    %1965 = vmatprep.subr.mxu0 0.0
    %1966 = vmatpush2.msra.mxu0 0.0
    %1967 = vmatprep.subr.mxu0 0.0
    %1968 = vmatpush2.msra.mxu0 0.0
    %1969 = vmatprep.mubr.f32.mxu0 0.0
    %1970 = vmatmul.mubr.f32.gmra.mxu0 %v1882
    %v1971 = vpop.f32.mrf.mxu0
    %v1972 = vadd.f32 %v1880, %v1971
    %v1973 = vpop.f32.mrf.mxu0
    %1974 = vmatprep.mubr.f32.mxu0 0.0
    %1975 = vmatmul.mubr.f32.gmra.mxu0 %v1885
    %v1976 = vpop.f32.mrf.mxu0
    %v1977 = vadd.f32 %v1880, %v1976
    %v1978 = vpop.f32.mrf.mxu0
    %1979 = vmatprep.mubr.f32.mxu0 0.0
    %1980 = vmatmul.mubr.f32.gmra.mxu0 %v1888
    %v1981 = vpop.f32.mrf.mxu0
    %v1982 = vadd.f32 %v1880, %v1981
    %v1983 = vpop.f32.mrf.mxu0
    %1984 = vmatprep.mubr.f32.mxu0 0.0
    %1985 = vmatmul.mubr.f32.gmra.mxu0 %v1891
    %v1986 = vpop.f32.mrf.mxu0
    %v1987 = vadd.f32 %v1880, %v1986
    %v1988 = vpop.f32.mrf.mxu0
    %1989 = vmatprep.mubr.f32.mxu0 0.0
    %1990 = vmatmul.mubr.f32.gmra.mxu0 %v1894
    %v1991 = vpop.f32.mrf.mxu0
    %v1992 = vadd.f32 %v1880, %v1991
    %v1993 = vpop.f32.mrf.mxu0
    %1994 = vmatprep.mubr.f32.mxu0 0.0
    %1995 = vmatmul.mubr.f32.gmra.mxu0 %v1897
    %v1996 = vpop.f32.mrf.mxu0
    %v1997 = vadd.f32 %v1880, %v1996
    %v1998 = vpop.f32.mrf.mxu0
    %1999 = vmatprep.mubr.f32.mxu0 0.0
    %2000 = vmatmul.mubr.f32.gmra.mxu0 %v1900
    %v2001 = vpop.f32.mrf.mxu0
    %v2002 = vadd.f32 %v1880, %v2001
    %v2003 = vpop.f32.mrf.mxu0
    %2004 = vmatprep.mubr.f32.mxu0 0.0
    %2005 = vmatmul.mubr.f32.gmra.mxu0 %v1903
    %v2006 = vpop.f32.mrf.mxu0
    %v2007 = vadd.f32 %v1880, %v2006
    %v2008 = vpop.f32.mrf.mxu0
    %2009 = vdwg.mxu0
    %v2010 = vmul.f32 %v1972, %v1972
    %v2011 = vmul.f32 %v1977, %v1977
    %v2012 = vmul.f32 %v1982, %v1982
    %v2013 = vmul.f32 %v1987, %v1987
    %v2014 = vmul.f32 %v1992, %v1992
    %v2015 = vmul.f32 %v1997, %v1997
    %v2016 = vmul.f32 %v2002, %v2002
    %v2017 = vmul.f32 %v2007, %v2007
    %v2018 = vsel %vm206, %v2010, 0.0
    %2019 = vadd.xlane.f32.xlu0 %v2018
    %v2020 = vpop.xlane.xlu0 %2019
    %v2021 = vsel %vm206, %v2011, 0.0
    %2022 = vadd.xlane.f32.xlu0 %v2021
    %v2023 = vpop.xlane.xlu0 %2022
    %v2024 = vsel %vm206, %v2012, 0.0
    %2025 = vadd.xlane.f32.xlu0 %v2024
    %v2026 = vpop.xlane.xlu0 %2025
    %v2027 = vsel %vm206, %v2013, 0.0
    %2028 = vadd.xlane.f32.xlu0 %v2027
    %v2029 = vpop.xlane.xlu0 %2028
    %v2030 = vsel %vm206, %v2014, 0.0
    %2031 = vadd.xlane.f32.xlu0 %v2030
    %v2032 = vpop.xlane.xlu0 %2031
    %v2033 = vsel %vm206, %v2015, 0.0
    %2034 = vadd.xlane.f32.xlu0 %v2033
    %v2035 = vpop.xlane.xlu0 %2034
    %v2036 = vsel %vm206, %v2016, 0.0
    %2037 = vadd.xlane.f32.xlu0 %v2036
    %v2038 = vpop.xlane.xlu0 %2037
    %v2039 = vsel %vm206, %v2017, 0.0
    %2040 = vadd.xlane.f32.xlu0 %v2039
    %v2041 = vpop.xlane.xlu0 %2040
    %v2042 = vmax.f32 %v2020, 1e-24
    %v2043 = vmax.f32 %v2023, 1e-24
    %v2044 = vmax.f32 %v2026, 1e-24
    %v2045 = vmax.f32 %v2029, 1e-24
    %v2046 = vmax.f32 %v2032, 1e-24
    %v2047 = vmax.f32 %v2035, 1e-24
    %v2048 = vmax.f32 %v2038, 1e-24
    %v2049 = vmax.f32 %v2041, 1e-24
    %v2050 = vrsqrt.pop %v2042
    %v2051 = vrsqrt.pop %v2043
    %v2052 = vrsqrt.pop %v2044
    %v2053 = vrsqrt.pop %v2045
    %v2054 = vrsqrt.pop %v2046
    %v2055 = vrsqrt.pop %v2047
    %v2056 = vrsqrt.pop %v2048
    %v2057 = vrsqrt.pop %v2049
    %v2058 = vmul.f32 %v1972, %v2050
    %v2059 = vmul.f32 %v1977, %v2051
    %v2060 = vmul.f32 %v1982, %v2052
    %v2061 = vmul.f32 %v1987, %v2053
    %v2062 = vmul.f32 %v1992, %v2054
    %v2063 = vmul.f32 %v1997, %v2055
    %v2064 = vmul.f32 %v2002, %v2056
    %v2065 = vmul.f32 %v2007, %v2057
    %v2066 = vmax.f32 %v2058, 0.0
    %v2067 = vmax.f32 %v2059, 0.0
    %v2068 = vmax.f32 %v2060, 0.0
    %v2069 = vmax.f32 %v2061, 0.0
    %v2070 = vmax.f32 %v2062, 0.0
    %v2071 = vmax.f32 %v2063, 0.0
    %v2072 = vmax.f32 %v2064, 0.0
    %v2073 = vmax.f32 %v2065, 0.0
    %v2075 = vsel %vm206, %v2066, 0
    %v2078 = vsel %vm206, %v2067, 0
    %v2081 = vsel %vm206, %v2068, 0
    %v2084 = vsel %vm206, %v2069, 0
    %v2087 = vsel %vm206, %v2070, 0
    %v2090 = vsel %vm206, %v2071, 0
    %v2093 = vsel %vm206, %v2072, 0
    %v2096 = vsel %vm206, %v2073, 0
    %2098 = vmatprep.subr.mxu0 0.0
    %2099 = vmatpush1.msra.mxu0 0.0
    %2100 = vmatprep.subr.mxu0 0.0
    %2101 = vmatpush1.msra.mxu0 0.0
    %2102 = vmatprep.subr.mxu0 0.0
    %2103 = vmatpush1.msra.mxu0 0.0
    %2104 = vmatprep.subr.mxu0 0.0
    %2105 = vmatpush1.msra.mxu0 0.0
    %2106 = vmatprep.subr.mxu0 0.0
    %2107 = vmatpush1.msra.mxu0 0.0
    %2108 = vmatprep.subr.mxu0 0.0
    %2109 = vmatpush1.msra.mxu0 0.0
    %2110 = vmatprep.subr.mxu0 0.0
    %2111 = vmatpush1.msra.mxu0 0.0
    %2112 = vmatprep.subr.mxu0 0.0
    %2113 = vmatpush1.msra.mxu0 0.0
    %2114 = vmatprep.subr.mxu0 0.0
    %2115 = vmatpush1.msra.mxu0 0.0
    %2116 = vmatprep.subr.mxu0 0.0
    %2117 = vmatpush1.msra.mxu0 0.0
    %2118 = vmatprep.subr.mxu0 0.0
    %2119 = vmatpush1.msra.mxu0 0.0
    %2120 = vmatprep.subr.mxu0 0.0
    %2121 = vmatpush1.msra.mxu0 0.0
    %2122 = vmatprep.subr.mxu0 0.0
    %2123 = vmatpush1.msra.mxu0 %v66
    %2124 = vmatprep.subr.mxu0 0.0
    %2125 = vmatpush1.msra.mxu0 %v65
    %2126 = vmatprep.subr.mxu0 0.0
    %2127 = vmatpush1.msra.mxu0 %v64
    %2128 = vmatprep.subr.mxu0 0.0
    %2129 = vmatpush1.msra.mxu0 %v63
    %2130 = vmatprep.subr.mxu0 0.0
    %2131 = vmatpush2.msra.mxu0 0.0
    %2132 = vmatprep.subr.mxu0 0.0
    %2133 = vmatpush2.msra.mxu0 0.0
    %2134 = vmatprep.subr.mxu0 0.0
    %2135 = vmatpush2.msra.mxu0 0.0
    %2136 = vmatprep.subr.mxu0 0.0
    %2137 = vmatpush2.msra.mxu0 0.0
    %2138 = vmatprep.subr.mxu0 0.0
    %2139 = vmatpush2.msra.mxu0 0.0
    %2140 = vmatprep.subr.mxu0 0.0
    %2141 = vmatpush2.msra.mxu0 0.0
    %2142 = vmatprep.subr.mxu0 0.0
    %2143 = vmatpush2.msra.mxu0 0.0
    %2144 = vmatprep.subr.mxu0 0.0
    %2145 = vmatpush2.msra.mxu0 0.0
    %2146 = vmatprep.subr.mxu0 0.0
    %2147 = vmatpush2.msra.mxu0 0.0
    %2148 = vmatprep.subr.mxu0 0.0
    %2149 = vmatpush2.msra.mxu0 0.0
    %2150 = vmatprep.subr.mxu0 0.0
    %2151 = vmatpush2.msra.mxu0 0.0
    %2152 = vmatprep.subr.mxu0 0.0
    %2153 = vmatpush2.msra.mxu0 0.0
    %2154 = vmatprep.subr.mxu0 0.0
    %2155 = vmatpush2.msra.mxu0 0.0
    %2156 = vmatprep.subr.mxu0 0.0
    %2157 = vmatpush2.msra.mxu0 0.0
    %2158 = vmatprep.subr.mxu0 0.0
    %2159 = vmatpush2.msra.mxu0 0.0
    %2160 = vmatprep.subr.mxu0 0.0
    %2161 = vmatpush2.msra.mxu0 0.0
    %2162 = vmatprep.mubr.f32.mxu0 0.0
    %2163 = vmatmul.mubr.f32.gmra.mxu0 %v2075
    %v2164 = vpop.f32.mrf.mxu0
    %v2165 = vadd.f32 0.0, %v2164
    %v2166 = vpop.f32.mrf.mxu0
    %2167 = vmatprep.mubr.f32.mxu0 0.0
    %2168 = vmatmul.mubr.f32.gmra.mxu0 %v2078
    %v2169 = vpop.f32.mrf.mxu0
    %v2170 = vadd.f32 0.0, %v2169
    %v2171 = vpop.f32.mrf.mxu0
    %2172 = vmatprep.mubr.f32.mxu0 0.0
    %2173 = vmatmul.mubr.f32.gmra.mxu0 %v2081
    %v2174 = vpop.f32.mrf.mxu0
    %v2175 = vadd.f32 0.0, %v2174
    %v2176 = vpop.f32.mrf.mxu0
    %2177 = vmatprep.mubr.f32.mxu0 0.0
    %2178 = vmatmul.mubr.f32.gmra.mxu0 %v2084
    %v2179 = vpop.f32.mrf.mxu0
    %v2180 = vadd.f32 0.0, %v2179
    %v2181 = vpop.f32.mrf.mxu0
    %2182 = vmatprep.mubr.f32.mxu0 0.0
    %2183 = vmatmul.mubr.f32.gmra.mxu0 %v2087
    %v2184 = vpop.f32.mrf.mxu0
    %v2185 = vadd.f32 0.0, %v2184
    %v2186 = vpop.f32.mrf.mxu0
    %2187 = vmatprep.mubr.f32.mxu0 0.0
    %2188 = vmatmul.mubr.f32.gmra.mxu0 %v2090
    %v2189 = vpop.f32.mrf.mxu0
    %v2190 = vadd.f32 0.0, %v2189
    %v2191 = vpop.f32.mrf.mxu0
    %2192 = vmatprep.mubr.f32.mxu0 0.0
    %2193 = vmatmul.mubr.f32.gmra.mxu0 %v2093
    %v2194 = vpop.f32.mrf.mxu0
    %v2195 = vadd.f32 0.0, %v2194
    %v2196 = vpop.f32.mrf.mxu0
    %2197 = vmatprep.mubr.f32.mxu0 0.0
    %2198 = vmatmul.mubr.f32.gmra.mxu0 %v2096
    %v2199 = vpop.f32.mrf.mxu0
    %v2200 = vadd.f32 0.0, %v2199
    %v2201 = vpop.f32.mrf.mxu0
    %2202 = vdwg.mxu0
    %v2203 = vadd.f32 %v1499, %v2165
    %v2204 = vadd.f32 %v1500, %v2170
    %v2205 = vadd.f32 %v1501, %v2175
    %v2206 = vadd.f32 %v1502, %v2180
    %v2207 = vadd.f32 %v1503, %v2185
    %v2208 = vadd.f32 %v1504, %v2190
    %v2209 = vadd.f32 %v1505, %v2195
    %v2210 = vadd.f32 %v1506, %v2200
    %2211 = vst [vmem:[%s3] sm:$0xff] %v2203
    %2212 = vst [vmem:[%s3 + $0x8] sm:$0xff] %v2204
    %2213 = vst [vmem:[%s3 + $0x10] sm:$0xff] %v2205
    %2214 = vst [vmem:[%s3 + $0x18] sm:$0xff] %v2206
    %2215 = vst [vmem:[%s3 + $0x20] sm:$0xff] %v2207
    %2216 = vst [vmem:[%s3 + $0x28] sm:$0xff] %v2208
    %2217 = vst [vmem:[%s3 + $0x30] sm:$0xff] %v2209
    %2218 = vst [vmem:[%s3 + $0x38] sm:$0xff] %v2210
    // Predicated region
    $region18: #{node_gat_forward.1} parent=1 // pred_check
      _
    $region19: #{node_gat_forward.1} parent=1 // pred_check_branch
      %2220 = sbr.rel (0) target = $region21
    $region20: #{node_gat_forward.1} parent=1 // pred_region
      _
    $region21: #{node_gat_forward.1} parent=1 // pred_fallthru
      _
    // Predicated region
    $region22: #{node_gat_forward.1} parent=1 // pred_check
      _
    $region23: #{node_gat_forward.1} parent=1 // pred_check_branch
      %2222 = sbr.rel (0) target = $region25
    $region24: #{node_gat_forward.1} parent=1 // pred_region
      _
    $region25: #{node_gat_forward.1} parent=1 // pred_fallthru
      _
    %2223 = vsyncpa [#allocation3], 1

</llo_original>
